<compile_context>
chip_gen: v7x
topology: tpu7x:2x2x1
jax: 0.10.0
libtpu: 0.0.40
codegen_flags: <defaults>
</compile_context>

<pallas_src>
import functools
import math

import jax
import jax.numpy as jnp
from jax import lax
from jax.experimental import pallas as pl
from jax.experimental.pallas import tpu as pltpu


_VMEM_LIMIT = 48 * 1024 * 1024   # leaves headroom under v7x's 64 MiB physical VMEM
_N_SPLITS = 2                    # stats-reduction split: feeds both v7x TensorCores;
                                 # a near-free extra loop level on 1-TC chips (v5e/v6e)


def _mxu_lane_target():
    """256-lane packing on 256x256-MXU chips (v6e/v7x), 128 on v5e and older."""
    try:
        kind = jax.devices()[0].device_kind.lower()
    except Exception:
        return 128
    for tag in ("v2", "v3", "v4", "v5"):
        if tag in kind:
            return 128
    return 256


# ----------------------------- kernels ------------------------------------------------------


def _stats_kernel(*refs, n_prior, relu_flags):
    """Accumulate per-lane sum / sum-of-squares of layer `n_prior`'s pre-BN activations.

    refs = [x_tile, (W, s, t) * n_prior, W_cur, sum_acc, sq_acc]
    grid = (split, step): `split` is "parallel" (one resident (8, lanes) accumulator per split,
    so the reduction shards across v7x's TensorCores), `step` is the "arbitrary" reduction axis.
    Prior layers are recomputed from x per tile (narrow channels -> cheap).  Zero-padded rows
    are NOT masked here; their analytically-known per-channel contribution is subtracted in the
    wrapper, which removes the old per-tile iota/compare/select VPU work entirely.
    """
    x_ref = refs[0]
    prior = [(refs[1 + 3 * p], refs[2 + 3 * p], refs[3 + 3 * p]) for p in range(n_prior)]
    w_ref = refs[1 + 3 * n_prior]
    sum_ref = refs[2 + 3 * n_prior]
    sq_ref = refs[3 + 3 * n_prior]

    @pl.when(pl.program_id(1) == 0)
    def _init():
        sum_ref[...] = jnp.zeros_like(sum_ref)
        sq_ref[...] = jnp.zeros_like(sq_ref)

    h = x_ref[...]
    for p, (wp, sp, tp) in enumerate(prior):
        y = jnp.dot(h, wp[...], preferred_element_type=jnp.float32)
        h = y * sp[...] + tp[...]
        if relu_flags[p]:
            h = jnp.maximum(h, 0.0)
    y = jnp.dot(h, w_ref[...], preferred_element_type=jnp.float32)

    rows, lanes = y.shape
    yg = y.reshape(rows // 8, 8, lanes)          # sublane-preserving view, no relayout
    sum_ref[...] += jnp.sum(yg, axis=0)
    sq_ref[...] += jnp.sum(yg * yg, axis=0)


def _fwd_kernel(*refs, n_layers, relu_flags):
    """Fused forward over all layers: matmul + folded-BN scale/shift (+ ReLU) per tile.

    refs = [x_tile, (W, s, t) * n_layers, out_tile]
    """
    x_ref = refs[0]
    layers = [(refs[1 + 3 * l], refs[2 + 3 * l], refs[3 + 3 * l]) for l in range(n_layers)]
    o_ref = refs[1 + 3 * n_layers]

    h = x_ref[...]
    for l, (wp, sp, tp) in enumerate(layers):
        y = jnp.dot(h, wp[...], preferred_element_type=jnp.float32)
        h = y * sp[...] + tp[...]
        if relu_flags[l]:
            h = jnp.maximum(h, 0.0)
    o_ref[...] = h.astype(o_ref.dtype)


# ----------------------------- wrapper ------------------------------------------------------


@functools.partial(jax.jit, static_argnames=("activations", "out_dtype"))
def fc_forward(x, params, activations, eps=1e-5, out_dtype=jnp.float32):
    """x: (B, T, N, C_in) -> (B, T, N, units[-1]).  Train-mode BN forward."""
    B, T, N, cin0 = x.shape
    M = B * T * N
    n_layers = len(params)
    couts = [p["w"].shape[1] for p in params]
    cout_last = couts[-1]
    relu_flags = tuple(a == "relu" for a in activations)
    hi = lax.Precision.HIGHEST

    # Lane-packing factor (MXU-width aware).  Rows are padded, never a pack=1 fallback
    # (unless cout doesn't divide 128, in which case narrow stores are unavoidable).
    lane_target = _mxu_lane_target()
    pack = 1
    for target in (lane_target, 128):
        if 0 < cout_last <= target and target % cout_last == 0:
            pack = target // cout_last
            break

    x2d = x.reshape(M, cin0).astype(jnp.float32)
    cin_p = pack * cin0

    # Packed-row tiling (2048 packed rows per step; few-MiB double-buffered footprint).
    mp = ((M + pack - 1) // pack) * pack // pack
    tile = 2048
    if mp < tile:
        tile = max(8, ((mp + 7) // 8) * 8)
    mp_pad = ((mp + _N_SPLITS * tile - 1) // (_N_SPLITS * tile)) * (_N_SPLITS * tile)
    steps = mp_pad // tile
    steps_per_split = steps // _N_SPLITS
    n_pad_rows = mp_pad * pack - M

    # Zero-pad rows and repack (bit-identical row-major view).
    xp = jnp.pad(x2d, ((0, n_pad_rows), (0, 0))).reshape(mp_pad, cin_p)

    # Block-diagonal packed weights.  Conv bias dropped: it cancels under train-mode BN.
    eye = jnp.eye(pack, dtype=jnp.float32)
    wps = [jnp.kron(eye, p["w"].astype(jnp.float32)) for p in params]

    # ---- BN fold helpers ---------------------------------------------------------------
    def fold_bn(csum, csq, p):
        mean = csum / M
        var = jnp.maximum(csq / M - mean * mean, 0.0)   # biased variance (train-mode BN)
        # TODO(synk): E[y^2]-E[y]^2 in f32 can lose precision for very large M or |mean|>>std;
        # a pilot-shift / Welford pass would be needed if tolerances tighten.
        s = p["gamma"].astype(jnp.float32) * lax.rsqrt(var + eps)
        t = p["beta"].astype(jnp.float32) - mean * s
        return s, t

    s_list, t_list = [], []      # per-channel (cout,) fold
    sp_list, tp_list = [], []    # packed (1, pack*cout) fold for the kernels

    def append_fold(s, t):
        s_list.append(s)
        t_list.append(t)
        sp_list.append(jnp.tile(s, pack).reshape(1, -1))
        tp_list.append(jnp.tile(t, pack).reshape(1, -1))

    # ---- layer 0 statistics in closed form (no preceding nonlinearity, no Pallas pass) ---
    #   sum(y0) = colsum(x) @ W0 ;  sum(y0^2) = diag(W0^T (X^T X) W0)
    w0 = params[0]["w"].astype(jnp.float32)
    colsum = jnp.sum(x2d, axis=0)
    gram = jnp.dot(x2d.T, x2d, precision=hi)              # (cin0, cin0), tiny
    sum0 = jnp.dot(colsum, w0, precision=hi)
    sq0 = jnp.sum(w0 * jnp.dot(gram, w0, precision=hi), axis=0)
    append_fold(*fold_bn(sum0, sq0, params[0]))

    # ---- layers >= 1: tiled Pallas stats pass, split across cores, accumulated resident --
    x_spec_stats = pl.BlockSpec((tile, cin_p), lambda c, i: (c * steps_per_split + i, 0))

    def full2(shape):
        return pl.BlockSpec(shape, lambda c, i: (0, 0))

    cp_stats = pltpu.CompilerParams(dimension_semantics=("parallel", "arbitrary"),
                                    vmem_limit_bytes=_VMEM_LIMIT)

    for li in range(1, n_layers):
        cout = couts[li]
        lanes = pack * cout

        in_specs = [x_spec_stats]
        operands = [xp]
        for q in range(li):
            in_specs += [full2(wps[q].shape), full2(sp_list[q].shape), full2(tp_list[q].shape)]
            operands += [wps[q], sp_list[q], tp_list[q]]
        in_specs.append(full2(wps[li].shape))
        operands.append(wps[li])

        kern = functools.partial(_stats_kernel, n_prior=li, relu_flags=relu_flags)
        acc_spec = pl.BlockSpec((8, lanes), lambda c, i: (c, 0))
        ssum, ssq = pl.pallas_call(
            kern,
            out_shape=(jax.ShapeDtypeStruct((_N_SPLITS * 8, lanes), jnp.float32),
                       jax.ShapeDtypeStruct((_N_SPLITS * 8, lanes), jnp.float32)),
            grid=(_N_SPLITS, steps_per_split),
            in_specs=in_specs,
            out_specs=(acc_spec, acc_spec),
            compiler_params=cp_stats,
        )(*operands)

        # Fold split/sublane partials and pack phases -> per-channel totals.
        csum = ssum.sum(axis=0).reshape(pack, cout).sum(axis=0)
        csq = ssq.sum(axis=0).reshape(pack, cout).sum(axis=0)

        # Subtract the analytically-known contribution of the zero-padded rows (replaces the
        # old per-tile iota/mask): a zero input row propagates to a fixed per-channel value.
        h_pad = jnp.zeros((cin0,), jnp.float32)
        for q in range(li):
            yq = jnp.dot(h_pad, params[q]["w"].astype(jnp.float32), precision=hi)
            h_pad = yq * s_list[q] + t_list[q]
            if relu_flags[q]:
                h_pad = jnp.maximum(h_pad, 0.0)
        y_pad = jnp.dot(h_pad, params[li]["w"].astype(jnp.float32), precision=hi)
        csum = csum - n_pad_rows * y_pad
        csq = csq - n_pad_rows * (y_pad * y_pad)

        append_fold(*fold_bn(csum, csq, params[li]))

    # ---- fused forward pass: x -> all layers -> lane-dense output ("parallel" row axis) --
    def full1(shape):
        return pl.BlockSpec(shape, lambda i: (0, 0))

    cp_fwd = pltpu.CompilerParams(dimension_semantics=("parallel",),
                                  vmem_limit_bytes=_VMEM_LIMIT)

    in_specs = [pl.BlockSpec((tile, cin_p), lambda i: (i, 0))]
    operands = [xp]
    for q in range(n_layers):
        in_specs += [full1(wps[q].shape), full1(sp_list[q].shape), full1(tp_list[q].shape)]
        operands += [wps[q], sp_list[q], tp_list[q]]
    out_lanes = pack * cout_last

    kern = functools.partial(_fwd_kernel, n_layers=n_layers, relu_flags=relu_flags)
    out = pl.pallas_call(
        kern,
        out_shape=jax.ShapeDtypeStruct((mp_pad, out_lanes), out_dtype),
        grid=(steps,),
        in_specs=in_specs,
        out_specs=pl.BlockSpec((tile, out_lanes), lambda i: (i, 0)),
        compiler_params=cp_fwd,
    )(*operands)

    out = out.reshape(mp_pad * pack, cout_last)[:M]
    return out.reshape(B, T, N, cout_last)


# ----------------------------- params / reference -------------------------------------------


def init_fc_params(key, input_dims, units):
    """Matches conv2d_ layer shapes (xavier-uniform conv weight, BN gamma=1 / beta=0).

    The conv bias is omitted on purpose: it is zero-initialized in the reference and any
    per-channel constant added before train-mode BatchNorm cancels exactly in the forward.
    """
    params = []
    for cin, cout in zip(input_dims, units):
        key, wk = jax.random.split(key)
        bound = math.sqrt(6.0 / (cin + cout))
        params.append(dict(
            w=jax.random.uniform(wk, (cin, cout), jnp.float32, -bound, bound),  # (Cin, Cout)
            gamma=jnp.ones((cout,), jnp.float32),   # BN weight
            beta=jnp.zeros((cout,), jnp.float32),   # BN bias
        ))
    return tuple(params)


def fc_reference(x, params, activations, eps=1e-5):
    """Pure-JAX reference of the PyTorch forward (train-mode BN)."""
    B, T, N, _ = x.shape
    h = x.reshape(-1, x.shape[-1]).astype(jnp.float32)
    for p, act in zip(params, activations):
        y = jnp.dot(h, p["w"], precision=lax.Precision.HIGHEST)
        mean = jnp.mean(y, axis=0)
        var = jnp.mean((y - mean) ** 2, axis=0)
        h = (y - mean) * lax.rsqrt(var + eps) * p["gamma"] + p["beta"]
        if act == "relu":
            h = jnp.maximum(h, 0.0)
    return h.reshape(B, T, N, -1)


# ----------------------------- demo ---------------------------------------------------------


if __name__ == "__main__":
    # FC(input_dims=[4, 32], units=[32, 32], activations=[F.relu, None], bn_decay=0.1)
    B, T, N, C_IN, D = 2, 8, 16, 4, 32
    input_dims = (C_IN, D)
    units = (D, D)
    activations = ("relu", None)

    key = jax.random.PRNGKey(0)
    k_x, k_p = jax.random.split(key)
    x = jax.random.normal(k_x, (B, T, N, C_IN), jnp.float32)
    params = init_fc_params(k_p, input_dims, units)

    out = fc_forward(x, params, activations=activations)
    out = jax.block_until_ready(out)
    assert out.shape == (B, T, N, D), out.shape

    ref = fc_reference(x, params, activations)
    max_err = float(jnp.max(jnp.abs(out - ref)))
    assert max_err < 5e-3, f"max abs error vs reference: {max_err}"
    print("KERNEL_OK")
</pallas_src>

<mosaic_0001>
module attributes {stable_mosaic.version = 11 : i64} {
  func.func @_stats_kernel(%arg0: i32, %arg1: i32, %arg2: memref<32x32xf32, #tpu.memory_space<vmem>>, %arg3: memref<32x256xf32, #tpu.memory_space<vmem>>, %arg4: memref<1x256xf32, #tpu.memory_space<vmem>>, %arg5: memref<1x256xf32, #tpu.memory_space<vmem>>, %arg6: memref<256x256xf32, #tpu.memory_space<vmem>>, %arg7: memref<8x256xf32, #tpu.memory_space<vmem>>, %arg8: memref<8x256xf32, #tpu.memory_space<vmem>>) attributes {dimension_semantics = [#tpu.dimension_semantics<parallel>, #tpu.dimension_semantics<arbitrary>], iteration_bounds = array<i64: 2, 1>, scalar_prefetch = 0 : i64, scratch_operands = 0 : i64, tpu.core_type = #tpu.core_type<tc>, window_params = [{transform_indices = @transform_0, window_bounds = array<i64: 32, 32>}, {pipeline_mode = #tpu.pipeline_mode<synchronous>, transform_indices = @transform_1, window_bounds = array<i64: 32, 256>}, {pipeline_mode = #tpu.pipeline_mode<synchronous>, transform_indices = @transform_2, window_bounds = array<i64: 1, 256>}, {pipeline_mode = #tpu.pipeline_mode<synchronous>, transform_indices = @transform_3, window_bounds = array<i64: 1, 256>}, {pipeline_mode = #tpu.pipeline_mode<synchronous>, transform_indices = @transform_4, window_bounds = array<i64: 256, 256>}, {transform_indices = @transform_5, window_bounds = array<i64: 8, 256>}, {transform_indices = @transform_6, window_bounds = array<i64: 8, 256>}]} {
    %c0_i32 = arith.constant 0 : i32
    %0 = arith.cmpi eq, %arg1, %c0_i32 : i32
    %1 = arith.extui %0 : i1 to i32
    %c0_i32_0 = arith.constant 0 : i32
    %2 = arith.cmpi ne, %1, %c0_i32_0 : i32
    scf.if %2 {
      %cst_22 = arith.constant 0.000000e+00 : f32
      %26 = vector.broadcast %cst_22 : f32 to vector<8x256xf32>
      %c0_23 = arith.constant 0 : index
      %c0_24 = arith.constant 0 : index
      %27 = vector.load %arg7[%c0_23, %c0_24] : memref<8x256xf32, #tpu.memory_space<vmem>>, vector<8x256xf32>
      tpu.vector_store %arg7[%c0_23, %c0_24], %26 {strides = array<i32>} : memref<8x256xf32, #tpu.memory_space<vmem>>, vector<8x256xf32>,
      %cst_25 = arith.constant 0.000000e+00 : f32
      %28 = vector.broadcast %cst_25 : f32 to vector<8x256xf32>
      %c0_26 = arith.constant 0 : index
      %c0_27 = arith.constant 0 : index
      %29 = vector.load %arg8[%c0_26, %c0_27] : memref<8x256xf32, #tpu.memory_space<vmem>>, vector<8x256xf32>
      tpu.vector_store %arg8[%c0_26, %c0_27], %28 {strides = array<i32>} : memref<8x256xf32, #tpu.memory_space<vmem>>, vector<8x256xf32>,
    } else {
    }
    %c0 = arith.constant 0 : index
    %c0_1 = arith.constant 0 : index
    %3 = vector.load %arg2[%c0, %c0_1] : memref<32x32xf32, #tpu.memory_space<vmem>>, vector<32x32xf32>
    %c0_2 = arith.constant 0 : index
    %c0_3 = arith.constant 0 : index
    %4 = vector.load %arg3[%c0_2, %c0_3] : memref<32x256xf32, #tpu.memory_space<vmem>>, vector<32x256xf32>
    %cst = arith.constant dense<0.000000e+00> : vector<32x256xf32>
    %5 = tpu.matmul %3, %4, %cst {dimension_numbers = #tpu.dot_dimension_numbers<[1], [0], [0], [1], [0, 0, 1, 1], [], []>} : vector<32x32xf32>, vector<32x256xf32>, vector<32x256xf32> -> vector<32x256xf32>
    %c0_4 = arith.constant 0 : index
    %c0_5 = arith.constant 0 : index
    %6 = vector.load %arg4[%c0_4, %c0_5] : memref<1x256xf32, #tpu.memory_space<vmem>>, vector<1x256xf32>
    %7 = vector.broadcast %6 : vector<1x256xf32> to vector<32x256xf32>
    %8 = arith.mulf %5, %7 : vector<32x256xf32>
    %c0_6 = arith.constant 0 : index
    %c0_7 = arith.constant 0 : index
    %9 = vector.load %arg5[%c0_6, %c0_7] : memref<1x256xf32, #tpu.memory_space<vmem>>, vector<1x256xf32>
    %10 = vector.broadcast %9 : vector<1x256xf32> to vector<32x256xf32>
    %11 = arith.addf %8, %10 : vector<32x256xf32>
    %cst_8 = arith.constant 0.000000e+00 : f32
    %12 = vector.broadcast %cst_8 : f32 to vector<32x256xf32>
    %13 = arith.maximumf %11, %12 : vector<32x256xf32>
    %c0_9 = arith.constant 0 : index
    %c0_10 = arith.constant 0 : index
    %14 = vector.load %arg6[%c0_9, %c0_10] : memref<256x256xf32, #tpu.memory_space<vmem>>, vector<256x256xf32>
    %cst_11 = arith.constant dense<0.000000e+00> : vector<32x256xf32>
    %15 = tpu.matmul %13, %14, %cst_11 {dimension_numbers = #tpu.dot_dimension_numbers<[1], [0], [0], [1], [0, 0, 1, 1], [], []>} : vector<32x256xf32>, vector<256x256xf32>, vector<32x256xf32> -> vector<32x256xf32>
    %16 = vector.shape_cast %15 : vector<32x256xf32> to vector<4x8x256xf32>
    %c0_12 = arith.constant 0 : index
    %c0_13 = arith.constant 0 : index
    %17 = vector.load %arg7[%c0_12, %c0_13] : memref<8x256xf32, #tpu.memory_space<vmem>>, vector<8x256xf32>
    %cst_14 = arith.constant dense<0.000000e+00> : vector<8x256xf32>
    %18 = vector.multi_reduction <add>, %16, %cst_14 [0] : vector<4x8x256xf32> to vector<8x256xf32>
    %19 = arith.addf %17, %18 : vector<8x256xf32>
    %c0_15 = arith.constant 0 : index
    %c0_16 = arith.constant 0 : index
    %20 = vector.load %arg7[%c0_15, %c0_16] : memref<8x256xf32, #tpu.memory_space<vmem>>, vector<8x256xf32>
    tpu.vector_store %arg7[%c0_15, %c0_16], %19 {strides = array<i32>} : memref<8x256xf32, #tpu.memory_space<vmem>>, vector<8x256xf32>,
    %c0_17 = arith.constant 0 : index
    %c0_18 = arith.constant 0 : index
    %21 = vector.load %arg8[%c0_17, %c0_18] : memref<8x256xf32, #tpu.memory_space<vmem>>, vector<8x256xf32>
    %22 = arith.mulf %16, %16 : vector<4x8x256xf32>
    %cst_19 = arith.constant dense<0.000000e+00> : vector<8x256xf32>
    %23 = vector.multi_reduction <add>, %22, %cst_19 [0] : vector<4x8x256xf32> to vector<8x256xf32>
    %24 = arith.addf %21, %23 : vector<8x256xf32>
    %c0_20 = arith.constant 0 : index
    %c0_21 = arith.constant 0 : index
    %25 = vector.load %arg8[%c0_20, %c0_21] : memref<8x256xf32, #tpu.memory_space<vmem>>, vector<8x256xf32>
    tpu.vector_store %arg8[%c0_20, %c0_21], %24 {strides = array<i32>} : memref<8x256xf32, #tpu.memory_space<vmem>>, vector<8x256xf32>,
    return
  }
  func.func @transform_0(%arg0: i32, %arg1: i32) -> (i32, i32) {
    %c1_i32 = arith.constant 1 : i32
    %0 = arith.muli %arg0, %c1_i32 : i32
    %1 = arith.addi %0, %arg1 : i32
    %c0_i32 = arith.constant 0 : i32
    %c0_i32_0 = arith.constant 0 : i32
    return %1, %c0_i32 : i32, i32
  }
  func.func @transform_1(%arg0: i32, %arg1: i32) -> (i32, i32) {
    %c0_i32 = arith.constant 0 : i32
    %c0_i32_0 = arith.constant 0 : i32
    %c0_i32_1 = arith.constant 0 : i32
    return %c0_i32, %c0_i32_0 : i32, i32
  }
  func.func @transform_2(%arg0: i32, %arg1: i32) -> (i32, i32) {
    %c0_i32 = arith.constant 0 : i32
    %c0_i32_0 = arith.constant 0 : i32
    %c0_i32_1 = arith.constant 0 : i32
    return %c0_i32, %c0_i32_0 : i32, i32
  }
  func.func @transform_3(%arg0: i32, %arg1: i32) -> (i32, i32) {
    %c0_i32 = arith.constant 0 : i32
    %c0_i32_0 = arith.constant 0 : i32
    %c0_i32_1 = arith.constant 0 : i32
    return %c0_i32, %c0_i32_0 : i32, i32
  }
  func.func @transform_4(%arg0: i32, %arg1: i32) -> (i32, i32) {
    %c0_i32 = arith.constant 0 : i32
    %c0_i32_0 = arith.constant 0 : i32
    %c0_i32_1 = arith.constant 0 : i32
    return %c0_i32, %c0_i32_0 : i32, i32
  }
  func.func @transform_5(%arg0: i32, %arg1: i32) -> (i32, i32) {
    %c0_i32 = arith.constant 0 : i32
    %c0_i32_0 = arith.constant 0 : i32
    return %arg0, %c0_i32 : i32, i32
  }
  func.func @transform_6(%arg0: i32, %arg1: i32) -> (i32, i32) {
    %c0_i32 = arith.constant 0 : i32
    %c0_i32_0 = arith.constant 0 : i32
    return %arg0, %c0_i32 : i32, i32
  }
}

module attributes {stable_mosaic.version = 11 : i64} {
  func.func @_fwd_kernel(%arg0: i32, %arg1: memref<32x32xf32, #tpu.memory_space<vmem>>, %arg2: memref<32x256xf32, #tpu.memory_space<vmem>>, %arg3: memref<1x256xf32, #tpu.memory_space<vmem>>, %arg4: memref<1x256xf32, #tpu.memory_space<vmem>>, %arg5: memref<256x256xf32, #tpu.memory_space<vmem>>, %arg6: memref<1x256xf32, #tpu.memory_space<vmem>>, %arg7: memref<1x256xf32, #tpu.memory_space<vmem>>, %arg8: memref<32x256xf32, #tpu.memory_space<vmem>>) attributes {dimension_semantics = [#tpu.dimension_semantics<parallel>], iteration_bounds = array<i64: 2>, scalar_prefetch = 0 : i64, scratch_operands = 0 : i64, tpu.core_type = #tpu.core_type<tc>, window_params = [{transform_indices = @transform_0, window_bounds = array<i64: 32, 32>}, {pipeline_mode = #tpu.pipeline_mode<synchronous>, transform_indices = @transform_1, window_bounds = array<i64: 32, 256>}, {pipeline_mode = #tpu.pipeline_mode<synchronous>, transform_indices = @transform_2, window_bounds = array<i64: 1, 256>}, {pipeline_mode = #tpu.pipeline_mode<synchronous>, transform_indices = @transform_3, window_bounds = array<i64: 1, 256>}, {pipeline_mode = #tpu.pipeline_mode<synchronous>, transform_indices = @transform_4, window_bounds = array<i64: 256, 256>}, {pipeline_mode = #tpu.pipeline_mode<synchronous>, transform_indices = @transform_5, window_bounds = array<i64: 1, 256>}, {pipeline_mode = #tpu.pipeline_mode<synchronous>, transform_indices = @transform_6, window_bounds = array<i64: 1, 256>}, {transform_indices = @transform_7, window_bounds = array<i64: 32, 256>}]} {
    %c0 = arith.constant 0 : index
    %c0_0 = arith.constant 0 : index
    %0 = vector.load %arg1[%c0, %c0_0] : memref<32x32xf32, #tpu.memory_space<vmem>>, vector<32x32xf32>
    %c0_1 = arith.constant 0 : index
    %c0_2 = arith.constant 0 : index
    %1 = vector.load %arg2[%c0_1, %c0_2] : memref<32x256xf32, #tpu.memory_space<vmem>>, vector<32x256xf32>
    %cst = arith.constant dense<0.000000e+00> : vector<32x256xf32>
    %2 = tpu.matmul %0, %1, %cst {dimension_numbers = #tpu.dot_dimension_numbers<[1], [0], [0], [1], [0, 0, 1, 1], [], []>} : vector<32x32xf32>, vector<32x256xf32>, vector<32x256xf32> -> vector<32x256xf32>
    %c0_3 = arith.constant 0 : index
    %c0_4 = arith.constant 0 : index
    %3 = vector.load %arg3[%c0_3, %c0_4] : memref<1x256xf32, #tpu.memory_space<vmem>>, vector<1x256xf32>
    %4 = vector.broadcast %3 : vector<1x256xf32> to vector<32x256xf32>
    %5 = arith.mulf %2, %4 : vector<32x256xf32>
    %c0_5 = arith.constant 0 : index
    %c0_6 = arith.constant 0 : index
    %6 = vector.load %arg4[%c0_5, %c0_6] : memref<1x256xf32, #tpu.memory_space<vmem>>, vector<1x256xf32>
    %7 = vector.broadcast %6 : vector<1x256xf32> to vector<32x256xf32>
    %8 = arith.addf %5, %7 : vector<32x256xf32>
    %cst_7 = arith.constant 0.000000e+00 : f32
    %9 = vector.broadcast %cst_7 : f32 to vector<32x256xf32>
    %10 = arith.maximumf %8, %9 : vector<32x256xf32>
    %c0_8 = arith.constant 0 : index
    %c0_9 = arith.constant 0 : index
    %11 = vector.load %arg5[%c0_8, %c0_9] : memref<256x256xf32, #tpu.memory_space<vmem>>, vector<256x256xf32>
    %cst_10 = arith.constant dense<0.000000e+00> : vector<32x256xf32>
    %12 = tpu.matmul %10, %11, %cst_10 {dimension_numbers = #tpu.dot_dimension_numbers<[1], [0], [0], [1], [0, 0, 1, 1], [], []>} : vector<32x256xf32>, vector<256x256xf32>, vector<32x256xf32> -> vector<32x256xf32>
    %c0_11 = arith.constant 0 : index
    %c0_12 = arith.constant 0 : index
    %13 = vector.load %arg6[%c0_11, %c0_12] : memref<1x256xf32, #tpu.memory_space<vmem>>, vector<1x256xf32>
    %14 = vector.broadcast %13 : vector<1x256xf32> to vector<32x256xf32>
    %15 = arith.mulf %12, %14 : vector<32x256xf32>
    %c0_13 = arith.constant 0 : index
    %c0_14 = arith.constant 0 : index
    %16 = vector.load %arg7[%c0_13, %c0_14] : memref<1x256xf32, #tpu.memory_space<vmem>>, vector<1x256xf32>
    %17 = vector.broadcast %16 : vector<1x256xf32> to vector<32x256xf32>
    %18 = arith.addf %15, %17 : vector<32x256xf32>
    %c0_15 = arith.constant 0 : index
    %c0_16 = arith.constant 0 : index
    %19 = vector.load %arg8[%c0_15, %c0_16] : memref<32x256xf32, #tpu.memory_space<vmem>>, vector<32x256xf32>
    tpu.vector_store %arg8[%c0_15, %c0_16], %18 {strides = array<i32>} : memref<32x256xf32, #tpu.memory_space<vmem>>, vector<32x256xf32>,
    return
  }
  func.func @transform_0(%arg0: i32) -> (i32, i32) {
    %c0_i32 = arith.constant 0 : i32
    %c0_i32_0 = arith.constant 0 : i32
    return %arg0, %c0_i32 : i32, i32
  }
  func.func @transform_1(%arg0: i32) -> (i32, i32) {
    %c0_i32 = arith.constant 0 : i32
    %c0_i32_0 = arith.constant 0 : i32
    %c0_i32_1 = arith.constant 0 : i32
    return %c0_i32, %c0_i32_0 : i32, i32
  }
  func.func @transform_2(%arg0: i32) -> (i32, i32) {
    %c0_i32 = arith.constant 0 : i32
    %c0_i32_0 = arith.constant 0 : i32
    %c0_i32_1 = arith.constant 0 : i32
    return %c0_i32, %c0_i32_0 : i32, i32
  }
  func.func @transform_3(%arg0: i32) -> (i32, i32) {
    %c0_i32 = arith.constant 0 : i32
    %c0_i32_0 = arith.constant 0 : i32
    %c0_i32_1 = arith.constant 0 : i32
    return %c0_i32, %c0_i32_0 : i32, i32
  }
  func.func @transform_4(%arg0: i32) -> (i32, i32) {
    %c0_i32 = arith.constant 0 : i32
    %c0_i32_0 = arith.constant 0 : i32
    %c0_i32_1 = arith.constant 0 : i32
    return %c0_i32, %c0_i32_0 : i32, i32
  }
  func.func @transform_5(%arg0: i32) -> (i32, i32) {
    %c0_i32 = arith.constant 0 : i32
    %c0_i32_0 = arith.constant 0 : i32
    %c0_i32_1 = arith.constant 0 : i32
    return %c0_i32, %c0_i32_0 : i32, i32
  }
  func.func @transform_6(%arg0: i32) -> (i32, i32) {
    %c0_i32 = arith.constant 0 : i32
    %c0_i32_0 = arith.constant 0 : i32
    %c0_i32_1 = arith.constant 0 : i32
    return %c0_i32, %c0_i32_0 : i32, i32
  }
  func.func @transform_7(%arg0: i32) -> (i32, i32) {
    %c0_i32 = arith.constant 0 : i32
    %c0_i32_0 = arith.constant 0 : i32
    return %arg0, %c0_i32 : i32, i32
  }
}

</mosaic_0001>

<llo_original>
// kernel: tile.23
$region0: #{tile.23}
  #allocation0 [shape = 's32[1]{0}', space=sflag, size = 0x4, scoped, tag = 'scoped memory for tile.23']
  %s0 = inlined_call_operand.vmem [shape: f32[32], index: 0, kind: input, shape index: {}]
  %s1 = inlined_call_operand.vmem [shape: f32[8,32], index: 1, kind: output, shape index: {}]
  // Predicated region
  $region2: #{tile.23} parent=0 // pred_check
    _
  $region3: #{tile.23} parent=0 // pred_check_branch
    %3 = sbr.rel (0) target = $region5
  $region4: #{tile.23} parent=0 // pred_region
    _
  $region5: #{tile.23} parent=0 // pred_fallthru
    _
  %v4 = vld [vmem:[%s0] ss:$0 sm:$0xff]
  %5 = vst [vmem:[%s1] sm:$0xff] %v4

// kernel: tile.24
$region0: #{tile.24}
  %s0 = inlined_call_operand.vmem [shape: f32[8,32], index: 0, kind: input, shape index: {}]
  %s1 = inlined_call_operand.vmem [shape: f32[1,256], index: 1, kind: output, shape index: {}]
  $region1: #{tile.24} parent=0
    #allocation0 [shape = 'u8[8192]{0}', space=vmem, size = 0x2000, scoped, tag = 'scoped mem for output reshape']
    %s2 = smov 3
    %v3 = vld [vmem:[%s0] ss:$4 sm:%s2]
    %vm4 = vcmask 261120
    %5 = vst.msk [vmem:[#allocation0] ss:$8 sm:$0x3] %vm4, %v3
    %s6 = scalar_lea.vmem %s0, 3
    %s7 = smov 3
    %v8 = vld [vmem:[%s6] ss:$4 sm:%s7]
    %9 = vrot.lane.b32.xlu0 %v8, 96
    %v10 = vpop.permute.xlu0 %9
    %vm11 = vcmask 1048320
    %12 = vst.msk [vmem:[#allocation0] ss:$8 sm:$0x3] %vm11, %v10
    %s13 = scalar_lea.vmem %s0, 2
    %s14 = smov 3
    %v15 = vld [vmem:[%s13] ss:$4 sm:%s14]
    %16 = vrot.lane.b32.xlu0 %v15, 64
    %v17 = vpop.permute.xlu0 %16
    %vm18 = vcmask 785920
    %19 = vst.msk [vmem:[#allocation0] ss:$8 sm:$0x3] %vm18, %v17
    %s20 = scalar_lea.vmem %s0, 1
    %s21 = smov 3
    %v22 = vld [vmem:[%s20] ss:$4 sm:%s21]
    %23 = vrot.lane.b32.xlu0 %v22, 32
    %v24 = vpop.permute.xlu0 %23
    %vm25 = vcmask 523520
    %26 = vst.msk [vmem:[#allocation0] ss:$8 sm:$0x3] %vm25, %v24
    %s28 = sshllo.u32 0, 1
    %v30 = vld [vmem:[#allocation0] sm:%s28]
    %s31 = sshllo.u32 0, 1
    %32 = vst [vmem:[%s1] sm:%s31] %v30
    %s33 = scalar_lea.vmem [#allocation0], 8
    %v34 = vld [vmem:[%s33] sm:%s28]
    %s35 = sshllo.u32 0, 1
    %s36 = scalar_lea.vmem %s1, 1
    %37 = vst [vmem:[%s36] sm:%s35] %v34

// kernel: fc_forward.3
$region0: #{fc_forward.3}
  #allocation0 [shape = 'u32[]', space=smem, size = 0x4, offset = 0x4, fixed_abs, tag = 'smem constant byte address 0x4 - core index']
  #allocation1 [shape = 'u32[144,128]{1,0:T(1,128)}', space=vmem, size = 0x12000, scoped, tag = 'internal scratch']
  %s0 = inlined_call_operand.vmem [shape: f32[64,32], index: 0, kind: input, shape index: {}]
  %s1 = inlined_call_operand.vmem [shape: f32[32,256], index: 1, kind: input, shape index: {}]
  %s2 = inlined_call_operand.vmem [shape: f32[1,256], index: 2, kind: input, shape index: {}]
  %s3 = inlined_call_operand.vmem [shape: f32[1,256], index: 3, kind: input, shape index: {}]
  %s4 = inlined_call_operand.vmem [shape: f32[256,256], index: 4, kind: input, shape index: {}]
  %s5 = inlined_call_operand.vmem [shape: f32[1,256], index: 5, kind: input, shape index: {}]
  %s6 = inlined_call_operand.vmem [shape: f32[1,256], index: 6, kind: input, shape index: {}]
  %s7 = inlined_call_operand.vmem [shape: f32[64,256], index: 7, kind: output, shape index: {}]
  %s8 = sld [smem:[#allocation0]]
  $region61: #{fc_forward.3} parent=0
    _
  %s10 = ssub.s32 1, %s8
  %s11 = scalar_select 0, %s10, %s8
  loop: start=0, step=1, limit=4
  $region2: #{fc_forward.3} parent=0 // loop_pre_header
    _
  $region3: #{fc_forward.3} parent=0 // loop_header
    %s13 = sphi 0, %s17
    %p14 = scmp.ge.s32.totalorder %s13, 4
    %s23 = sphi 0, %s25
    %s26 = sphi 0, %s23
    %s27 = sphi 0, %s26
    %s43 = sphi 0, %s27
    %s47 = sphi 0, %s47
    %s49 = sphi 0, %s47
    %s50 = sphi 0, %s49
    %s64 = sphi 0, %s50
    %s68 = sphi 0, %s68
    %s70 = sphi 0, %s68
    %s71 = sphi 0, %s70
    %s85 = sphi 0, %s71
    %s89 = sphi 0, %s89
    %s91 = sphi 0, %s89
    %s92 = sphi 0, %s91
    %s106 = sphi 0, %s92
    %s110 = sphi 0, %s110
    %s112 = sphi 0, %s110
    %s113 = sphi 0, %s112
    %s127 = sphi 0, %s113
    %s131 = sphi 0, %s131
    %s133 = sphi 0, %s131
    %s134 = sphi 0, %s133
    %s148 = sphi 0, %s134
    %s152 = sphi 0, %s152
    %s154 = sphi 0, %s152
    %s155 = sphi 0, %s154
    %s169 = sphi 0, %s155
    %s175 = sphi 0, %s177
    %s178 = sphi 0, %s175
    %s179 = sphi 0, %s178
    %s195 = sphi 0, %s179
  $region4: #{fc_forward.3} parent=0 // loop_header_branch
    %16 = sbr.rel (%p14) target = $region8
  $region5: #{fc_forward.3} parent=0 // loop_body
    %s18 = ssub.s32 %s13, 1
    %s19 = ssub.s32 %s13, 2
    %s20 = sadd.s32 %s13, 1
    %s21 = ssub.s32 %s13, %s20
    %p22 = scmp.eq.s32.totalorder %s21, 0
    %s24 = sadd.s32 %s23, 1
    %s25 = scalar_select %p22, %s23, %s24
    %p28 = pneg %p22
    %p29 = scmp.eq.s32.totalorder %s13, 1
    %p30 = por %p28, %p29
    %p31 = scmp.ne.s32.totalorder %s23, %s26
    %p32 = scmp.eq.s32.totalorder %s13, 0
    %p33 = por %p31, %p32
    %p34 = scmp.ne.s32.totalorder %s23, %s26
    %p35 = scmp.eq.s32.totalorder %s18, 1
    %p36 = por %p34, %p35
    %p37 = scmp.ne.s32.totalorder %s26, %s27
    %p38 = scmp.eq.s32.totalorder %s18, 0
    %p39 = por %p37, %p38
    %p40 = scmp.ne.s32.totalorder %s26, %s27
    %p41 = scmp.eq.s32.totalorder %s19, 1
    %p42 = por %p40, %p41
    %p44 = scmp.ne.s32.totalorder %s27, %s43
    %p45 = scmp.eq.s32.totalorder %s19, 0
    %p46 = por %p44, %p45
    %s48 = sadd.s32 %s47, 1
    %p51 = scmp.eq.s32.totalorder %s13, 1
    %p52 = scmp.ne.s32.totalorder %s47, %s49
    %p53 = scmp.eq.s32.totalorder %s13, 0
    %p54 = por %p52, %p53
    %p55 = scmp.ne.s32.totalorder %s47, %s49
    %p56 = scmp.eq.s32.totalorder %s18, 1
    %p57 = por %p55, %p56
    %p58 = scmp.ne.s32.totalorder %s49, %s50
    %p59 = scmp.eq.s32.totalorder %s18, 0
    %p60 = por %p58, %p59
    %p61 = scmp.ne.s32.totalorder %s49, %s50
    %p62 = scmp.eq.s32.totalorder %s19, 1
    %p63 = por %p61, %p62
    %p65 = scmp.ne.s32.totalorder %s50, %s64
    %p66 = scmp.eq.s32.totalorder %s19, 0
    %p67 = por %p65, %p66
    %s69 = sadd.s32 %s68, 1
    %p72 = scmp.eq.s32.totalorder %s13, 1
    %p73 = scmp.ne.s32.totalorder %s68, %s70
    %p74 = scmp.eq.s32.totalorder %s13, 0
    %p75 = por %p73, %p74
    %p76 = scmp.ne.s32.totalorder %s68, %s70
    %p77 = scmp.eq.s32.totalorder %s18, 1
    %p78 = por %p76, %p77
    %p79 = scmp.ne.s32.totalorder %s70, %s71
    %p80 = scmp.eq.s32.totalorder %s18, 0
    %p81 = por %p79, %p80
    %p82 = scmp.ne.s32.totalorder %s70, %s71
    %p83 = scmp.eq.s32.totalorder %s19, 1
    %p84 = por %p82, %p83
    %p86 = scmp.ne.s32.totalorder %s71, %s85
    %p87 = scmp.eq.s32.totalorder %s19, 0
    %p88 = por %p86, %p87
    %s90 = sadd.s32 %s89, 1
    %p93 = scmp.eq.s32.totalorder %s13, 1
    %p94 = scmp.ne.s32.totalorder %s89, %s91
    %p95 = scmp.eq.s32.totalorder %s13, 0
    %p96 = por %p94, %p95
    %p97 = scmp.ne.s32.totalorder %s89, %s91
    %p98 = scmp.eq.s32.totalorder %s18, 1
    %p99 = por %p97, %p98
    %p100 = scmp.ne.s32.totalorder %s91, %s92
    %p101 = scmp.eq.s32.totalorder %s18, 0
    %p102 = por %p100, %p101
    %p103 = scmp.ne.s32.totalorder %s91, %s92
    %p104 = scmp.eq.s32.totalorder %s19, 1
    %p105 = por %p103, %p104
    %p107 = scmp.ne.s32.totalorder %s92, %s106
    %p108 = scmp.eq.s32.totalorder %s19, 0
    %p109 = por %p107, %p108
    %s111 = sadd.s32 %s110, 1
    %p114 = scmp.eq.s32.totalorder %s13, 1
    %p115 = scmp.ne.s32.totalorder %s110, %s112
    %p116 = scmp.eq.s32.totalorder %s13, 0
    %p117 = por %p115, %p116
    %p118 = scmp.ne.s32.totalorder %s110, %s112
    %p119 = scmp.eq.s32.totalorder %s18, 1
    %p120 = por %p118, %p119
    %p121 = scmp.ne.s32.totalorder %s112, %s113
    %p122 = scmp.eq.s32.totalorder %s18, 0
    %p123 = por %p121, %p122
    %p124 = scmp.ne.s32.totalorder %s112, %s113
    %p125 = scmp.eq.s32.totalorder %s19, 1
    %p126 = por %p124, %p125
    %p128 = scmp.ne.s32.totalorder %s113, %s127
    %p129 = scmp.eq.s32.totalorder %s19, 0
    %p130 = por %p128, %p129
    %s132 = sadd.s32 %s131, 1
    %p135 = scmp.eq.s32.totalorder %s13, 1
    %p136 = scmp.ne.s32.totalorder %s131, %s133
    %p137 = scmp.eq.s32.totalorder %s13, 0
    %p138 = por %p136, %p137
    %p139 = scmp.ne.s32.totalorder %s131, %s133
    %p140 = scmp.eq.s32.totalorder %s18, 1
    %p141 = por %p139, %p140
    %p142 = scmp.ne.s32.totalorder %s133, %s134
    %p143 = scmp.eq.s32.totalorder %s18, 0
    %p144 = por %p142, %p143
    %p145 = scmp.ne.s32.totalorder %s133, %s134
    %p146 = scmp.eq.s32.totalorder %s19, 1
    %p147 = por %p145, %p146
    %p149 = scmp.ne.s32.totalorder %s134, %s148
    %p150 = scmp.eq.s32.totalorder %s19, 0
    %p151 = por %p149, %p150
    %s153 = sadd.s32 %s152, 1
    %p156 = scmp.eq.s32.totalorder %s13, 1
    %p157 = scmp.ne.s32.totalorder %s152, %s154
    %p158 = scmp.eq.s32.totalorder %s13, 0
    %p159 = por %p157, %p158
    %p160 = scmp.ne.s32.totalorder %s152, %s154
    %p161 = scmp.eq.s32.totalorder %s18, 1
    %p162 = por %p160, %p161
    %p163 = scmp.ne.s32.totalorder %s154, %s155
    %p164 = scmp.eq.s32.totalorder %s18, 0
    %p165 = por %p163, %p164
    %p166 = scmp.ne.s32.totalorder %s154, %s155
    %p167 = scmp.eq.s32.totalorder %s19, 1
    %p168 = por %p166, %p167
    %p170 = scmp.ne.s32.totalorder %s155, %s169
    %p171 = scmp.eq.s32.totalorder %s19, 0
    %p172 = por %p170, %p171
    %s173 = ssub.s32 %s13, %s20
    %p174 = scmp.eq.s32.totalorder %s173, 0
    %s176 = sadd.s32 %s175, 1
    %s177 = scalar_select %p174, %s175, %s176
    %p180 = pneg %p174
    %p181 = scmp.eq.s32.totalorder %s13, 1
    %p182 = por %p180, %p181
    %p183 = scmp.ne.s32.totalorder %s175, %s178
    %p184 = scmp.eq.s32.totalorder %s13, 0
    %p185 = por %p183, %p184
    %p186 = scmp.ne.s32.totalorder %s175, %s178
    %p187 = scmp.eq.s32.totalorder %s18, 1
    %p188 = por %p186, %p187
    %p189 = scmp.ne.s32.totalorder %s178, %s179
    %p190 = scmp.eq.s32.totalorder %s18, 0
    %p191 = por %p189, %p190
    %p192 = scmp.ne.s32.totalorder %s178, %s179
    %p193 = scmp.eq.s32.totalorder %s19, 1
    %p194 = por %p192, %p193
    %p196 = scmp.ne.s32.totalorder %s179, %s195
    %p197 = scmp.eq.s32.totalorder %s19, 0
    %p198 = por %p196, %p197
    %p199 = scmp.le.s32.totalorder 1, %s13
    %p200 = scmp.lt.s32.totalorder %s13, 3
    %p201 = pnand %p199, %p200
    %p202 = pneg %p201
    // Predicated region
    $region9: #{fc_forward.3} parent=5 // pred_check
      _
    $region10: #{fc_forward.3} parent=5 // pred_check_branch
      %204 = sbr.rel (%p201) target = $region12
    $region11: #{fc_forward.3} parent=5 // pred_region
      %s205 = ssub.s32 %s13, 1
      // Predicated region
      $region13: #{fc_forward.3} parent=11 // pred_check
        %p206 = pneg %p60
      $region14: #{fc_forward.3} parent=11 // pred_check_branch
        %208 = sbr.rel (%p206) target = $region16
      $region15: #{fc_forward.3} parent=11 // pred_region
        _
      $region16: #{fc_forward.3} parent=11 // pred_fallthru
        _
      // Predicated region
      $region17: #{fc_forward.3} parent=11 // pred_check
        %p209 = pneg %p81
      $region18: #{fc_forward.3} parent=11 // pred_check_branch
        %211 = sbr.rel (%p209) target = $region20
      $region19: #{fc_forward.3} parent=11 // pred_region
        _
      $region20: #{fc_forward.3} parent=11 // pred_fallthru
        _
      // Predicated region
      $region21: #{fc_forward.3} parent=11 // pred_check
        %p212 = pneg %p102
      $region22: #{fc_forward.3} parent=11 // pred_check_branch
        %214 = sbr.rel (%p212) target = $region24
      $region23: #{fc_forward.3} parent=11 // pred_region
        _
      $region24: #{fc_forward.3} parent=11 // pred_fallthru
        _
      // Predicated region
      $region25: #{fc_forward.3} parent=11 // pred_check
        %p215 = pneg %p123
      $region26: #{fc_forward.3} parent=11 // pred_check_branch
        %217 = sbr.rel (%p215) target = $region28
      $region27: #{fc_forward.3} parent=11 // pred_region
        _
      $region28: #{fc_forward.3} parent=11 // pred_fallthru
        _
      // Predicated region
      $region29: #{fc_forward.3} parent=11 // pred_check
        %p218 = pneg %p144
      $region30: #{fc_forward.3} parent=11 // pred_check_branch
        %220 = sbr.rel (%p218) target = $region32
      $region31: #{fc_forward.3} parent=11 // pred_region
        _
      $region32: #{fc_forward.3} parent=11 // pred_fallthru
        _
      // Predicated region
      $region33: #{fc_forward.3} parent=11 // pred_check
        %p221 = pneg %p165
      $region34: #{fc_forward.3} parent=11 // pred_check_branch
        %223 = sbr.rel (%p221) target = $region36
      $region35: #{fc_forward.3} parent=11 // pred_region
        _
      $region36: #{fc_forward.3} parent=11 // pred_fallthru
        _
    $region12: #{fc_forward.3} parent=5 // pred_fallthru
      _
    %p224 = scmp.lt.s32.totalorder %s13, 2
    // Predicated region
    $region37: #{fc_forward.3} parent=5 // pred_check
      %p225 = pneg %p224
    $region38: #{fc_forward.3} parent=5 // pred_check_branch
      %227 = sbr.rel (%p225) target = $region40
    $region39: #{fc_forward.3} parent=5 // pred_region
      // Predicated region
      $region41: #{fc_forward.3} parent=39 // pred_check
        %p228 = pneg %p33
      $region42: #{fc_forward.3} parent=39 // pred_check_branch
        %230 = sbr.rel (%p228) target = $region44
      $region43: #{fc_forward.3} parent=39 // pred_region
        %s231 = smul.u32 4, %s13
        %p232 = scmp.lt.s32.totalorder %s231, 7
        %s233 = scalar_select %p232, %s231, 7
        %s234 = smul.addr %s233, 8
        %s235 = scalar_lea.vmem %s0, %s234
        %s236 = smul.u32 4, %s13
      $region44: #{fc_forward.3} parent=39 // pred_fallthru
        _
    $region40: #{fc_forward.3} parent=5 // pred_fallthru
      _
    %p237 = scmp.le.s32.totalorder 1, %s13
    %p238 = scmp.lt.s32.totalorder %s13, 3
    %p239 = pnand %p237, %p238
    %p240 = pneg %p239
    // Predicated region
    $region45: #{fc_forward.3} parent=5 // pred_check
      _
    $region46: #{fc_forward.3} parent=5 // pred_check_branch
      %242 = sbr.rel (%p239) target = $region48
    $region47: #{fc_forward.3} parent=5 // pred_region
      %s243 = ssub.s32 %s13, 1
      %s244 = smul.u32 4, %s18
      %p245 = scmp.lt.s32.totalorder %s244, 7
      %s246 = scalar_select %p245, %s244, 7
      %s247 = smul.addr %s246, 8
      %s248 = scalar_lea.vmem %s0, %s247
      %p249 = pneg %p39
      %p250 = pneg %p36
      %p251 = pneg %p60
      %p252 = pneg %p57
      %p253 = pneg %p81
      %p254 = pneg %p78
      %p255 = pneg %p102
      %p256 = pneg %p99
      %p257 = pneg %p123
      %p258 = pneg %p120
      %p259 = pneg %p144
      %p260 = pneg %p141
      %p261 = pneg %p165
      %p262 = pneg %p162
      %p263 = pneg %p191
      %p264 = pneg %p188
      %s265 = smul.u32 4, %s18
      %p266 = scmp.lt.s32.totalorder %s265, 7
      %s267 = scalar_select %p266, %s265, 7
      %s268 = smul.addr %s267, 2
      %s269 = smul.addr %s268, 8
      %s270 = scalar_lea.vmem %s7, %s269
      %s271 = smul.u32 4, %s18
      %p272 = scmp.lt.s32.totalorder %s271, 7
      %s273 = scalar_select %p272, %s271, 7
      %s274 = smul.addr %s273, 8
      %s275 = scalar_lea.vmem %s0, %s274
      %s276 = smul.u32 4, %s18
      %s277 = smul.u32 4, %s18
      %p278 = scmp.lt.s32.totalorder %s277, 7
      %s279 = scalar_select %p278, %s277, 7
      %s280 = smul.addr %s279, 2
      %s281 = smul.addr %s280, 8
      %s282 = scalar_lea.vmem %s7, %s281
      %s283 = smul.u32 4, %s18
      %v284 = vld [vmem:[%s275] sm:$0xff]
      %v285 = vld [vmem:[%s275 + $0x8] sm:$0xff]
      %v286 = vld [vmem:[%s275 + $0x10] sm:$0xff]
      %v287 = vld [vmem:[%s275 + $0x18] sm:$0xff]
      %v288 = vld [vmem:[%s1] sm:$0xff]
      %v289 = vld [vmem:[%s1 + $0x8] sm:$0xff]
      %v290 = vld [vmem:[%s1 + $0x10] sm:$0xff]
      %v291 = vld [vmem:[%s1 + $0x18] sm:$0xff]
      %v292 = vld [vmem:[%s1 + $0x20] sm:$0xff]
      %v293 = vld [vmem:[%s1 + $0x28] sm:$0xff]
      %v294 = vld [vmem:[%s1 + $0x30] sm:$0xff]
      %v295 = vld [vmem:[%s1 + $0x38] sm:$0xff]
      %vm296 = vcmask 261120
      %v298 = vsel %vm296, %v284, 0
      %v301 = vsel %vm296, %v285, 0
      %v304 = vsel %vm296, %v286, 0
      %v307 = vsel %vm296, %v287, 0
      %309 = vmatprep.subr.mxu0 %v289
      %310 = vmatpush1.msra.mxu0 %v288
      %311 = vmatprep.subr.mxu0 %v291
      %312 = vmatpush1.msra.mxu0 %v290
      %313 = vmatprep.subr.mxu0 %v293
      %314 = vmatpush1.msra.mxu0 %v292
      %315 = vmatprep.subr.mxu0 %v295
      %316 = vmatpush1.msra.mxu0 %v294
      %317 = vmatprep.subr.mxu0 0.0
      %318 = vmatpush1.msra.mxu0 0.0
      %319 = vmatprep.subr.mxu0 0.0
      %320 = vmatpush1.msra.mxu0 0.0
      %321 = vmatprep.subr.mxu0 0.0
      %322 = vmatpush1.msra.mxu0 0.0
      %323 = vmatprep.subr.mxu0 0.0
      %324 = vmatpush1.msra.mxu0 0.0
      %325 = vmatprep.subr.mxu0 0.0
      %326 = vmatpush1.msra.mxu0 0.0
      %327 = vmatprep.subr.mxu0 0.0
      %328 = vmatpush1.msra.mxu0 0.0
      %329 = vmatprep.subr.mxu0 0.0
      %330 = vmatpush1.msra.mxu0 0.0
      %331 = vmatprep.subr.mxu0 0.0
      %332 = vmatpush1.msra.mxu0 0.0
      %333 = vmatprep.subr.mxu0 0.0
      %334 = vmatpush1.msra.mxu0 0.0
      %335 = vmatprep.subr.mxu0 0.0
      %336 = vmatpush1.msra.mxu0 0.0
      %337 = vmatprep.subr.mxu0 0.0
      %338 = vmatpush1.msra.mxu0 0.0
      %339 = vmatprep.subr.mxu0 0.0
      %340 = vmatpush1.msra.mxu0 0.0
      %341 = vmatprep.subr.mxu0 0.0
      %342 = vmatpush1.msra.mxu0 0.0
      %343 = vmatprep.subr.mxu0 0.0
      %344 = vmatpush1.msra.mxu0 0.0
      %345 = vmatprep.subr.mxu0 0.0
      %346 = vmatpush1.msra.mxu0 0.0
      %347 = vmatprep.subr.mxu0 0.0
      %348 = vmatpush1.msra.mxu0 0.0
      %349 = vmatprep.subr.mxu0 0.0
      %350 = vmatpush1.msra.mxu0 0.0
      %351 = vmatprep.subr.mxu0 0.0
      %352 = vmatpush1.msra.mxu0 0.0
      %353 = vmatprep.subr.mxu0 0.0
      %354 = vmatpush1.msra.mxu0 0.0
      %355 = vmatprep.subr.mxu0 0.0
      %356 = vmatpush1.msra.mxu0 0.0
      %357 = vmatprep.subr.mxu0 0.0
      %358 = vmatpush1.msra.mxu0 0.0
      %359 = vmatprep.subr.mxu0 0.0
      %360 = vmatpush1.msra.mxu0 0.0
      %361 = vmatprep.subr.mxu0 0.0
      %362 = vmatpush1.msra.mxu0 0.0
      %363 = vmatprep.subr.mxu0 0.0
      %364 = vmatpush1.msra.mxu0 0.0
      %365 = vmatprep.subr.mxu0 0.0
      %366 = vmatpush1.msra.mxu0 0.0
      %367 = vmatprep.subr.mxu0 0.0
      %368 = vmatpush1.msra.mxu0 0.0
      %369 = vmatprep.subr.mxu0 0.0
      %370 = vmatpush1.msra.mxu0 0.0
      %371 = vmatprep.subr.mxu0 0.0
      %372 = vmatpush1.msra.mxu0 0.0
      %373 = vmatprep.mubr.f32.mxu0 0.0
      %374 = vmatmul.mubr.f32.gmra.mrb[0].mxu0 %v298
      %v375 = vpop.f32.mrb[0].mxu0
      %v376 = vadd.f32 0.0, %v375
      %v377 = vpop.f32.mrb[0].mxu0
      %v378 = vadd.f32 0.0, %v377
      %379 = vmatprep.mubr.f32.mxu0 0.0
      %380 = vmatmul.mubr.f32.gmra.mrb[0].mxu0 %v301
      %v381 = vpop.f32.mrb[0].mxu0
      %v382 = vadd.f32 0.0, %v381
      %v383 = vpop.f32.mrb[0].mxu0
      %v384 = vadd.f32 0.0, %v383
      %385 = vmatprep.mubr.f32.mxu0 0.0
      %386 = vmatmul.mubr.f32.gmra.mrb[0].mxu0 %v304
      %v387 = vpop.f32.mrb[0].mxu0
      %v388 = vadd.f32 0.0, %v387
      %v389 = vpop.f32.mrb[0].mxu0
      %v390 = vadd.f32 0.0, %v389
      %391 = vmatprep.mubr.f32.mxu0 0.0
      %392 = vmatmul.mubr.f32.gmra.mrb[0].mxu0 %v307
      %v393 = vpop.f32.mrb[0].mxu0
      %v394 = vadd.f32 0.0, %v393
      %v395 = vpop.f32.mrb[0].mxu0
      %v396 = vadd.f32 0.0, %v395
      %397 = vdwg.mxu0
      %v398 = vld [vmem:[%s2] sm:$0x3]
      %v400 = vlaneseq
      %v401 = vshrl.u32 %v400, 7
      %v402 = vsub.s32 0, %v401
      %v403 = vrot.slane %v398, %v402
      %v404 = vlaneseq
      %v405 = vshrl.u32 %v404, 7
      %v406 = vsub.s32 1, %v405
      %v407 = vrot.slane %v398, %v406
      %v410 = vmul.f32 %v376, %v403
      %v411 = vmul.f32 %v378, %v407
      %v412 = vmul.f32 %v382, %v403
      %v413 = vmul.f32 %v384, %v407
      %v414 = vmul.f32 %v388, %v403
      %v415 = vmul.f32 %v390, %v407
      %v416 = vmul.f32 %v394, %v403
      %v417 = vmul.f32 %v396, %v407
      %v418 = vld [vmem:[%s3] sm:$0x3]
      %v420 = vlaneseq
      %v421 = vshrl.u32 %v420, 7
      %v422 = vsub.s32 0, %v421
      %v423 = vrot.slane %v418, %v422
      %v424 = vlaneseq
      %v425 = vshrl.u32 %v424, 7
      %v426 = vsub.s32 1, %v425
      %v427 = vrot.slane %v418, %v426
      %v430 = vadd.f32 %v410, %v423
      %v431 = vadd.f32 %v411, %v427
      %v432 = vadd.f32 %v412, %v423
      %v433 = vadd.f32 %v413, %v427
      %v434 = vadd.f32 %v414, %v423
      %v435 = vadd.f32 %v415, %v427
      %v436 = vadd.f32 %v416, %v423
      %v437 = vadd.f32 %v417, %v427
      %v438 = vmax.f32 %v430, 0.0
      %v439 = vmax.f32 %v431, 0.0
      %v440 = vmax.f32 %v432, 0.0
      %v441 = vmax.f32 %v433, 0.0
      %v442 = vmax.f32 %v434, 0.0
      %v443 = vmax.f32 %v435, 0.0
      %v444 = vmax.f32 %v436, 0.0
      %v445 = vmax.f32 %v437, 0.0
      %v446 = vld [vmem:[%s4] sm:$0xff]
      %v447 = vld [vmem:[%s4 + $0x8] sm:$0xff]
      %v448 = vld [vmem:[%s4 + $0x10] sm:$0xff]
      %v449 = vld [vmem:[%s4 + $0x18] sm:$0xff]
      %v450 = vld [vmem:[%s4 + $0x20] sm:$0xff]
      %v451 = vld [vmem:[%s4 + $0x28] sm:$0xff]
      %v452 = vld [vmem:[%s4 + $0x30] sm:$0xff]
      %v453 = vld [vmem:[%s4 + $0x38] sm:$0xff]
      %v454 = vld [vmem:[%s4 + $0x40] sm:$0xff]
      %v455 = vld [vmem:[%s4 + $0x48] sm:$0xff]
      %v456 = vld [vmem:[%s4 + $0x50] sm:$0xff]
      %v457 = vld [vmem:[%s4 + $0x58] sm:$0xff]
      %v458 = vld [vmem:[%s4 + $0x60] sm:$0xff]
      %v459 = vld [vmem:[%s4 + $0x68] sm:$0xff]
      %v460 = vld [vmem:[%s4 + $0x70] sm:$0xff]
      %v461 = vld [vmem:[%s4 + $0x78] sm:$0xff]
      %v462 = vld [vmem:[%s4 + $0x80] sm:$0xff]
      %v463 = vld [vmem:[%s4 + $0x88] sm:$0xff]
      %v464 = vld [vmem:[%s4 + $0x90] sm:$0xff]
      %v465 = vld [vmem:[%s4 + $0x98] sm:$0xff]
      %v466 = vld [vmem:[%s4 + $0xa0] sm:$0xff]
      %v467 = vld [vmem:[%s4 + $0xa8] sm:$0xff]
      %v468 = vld [vmem:[%s4 + $0xb0] sm:$0xff]
      %v469 = vld [vmem:[%s4 + $0xb8] sm:$0xff]
      %v470 = vld [vmem:[%s4 + $0xc0] sm:$0xff]
      %v471 = vld [vmem:[%s4 + $0xc8] sm:$0xff]
      %v472 = vld [vmem:[%s4 + $0xd0] sm:$0xff]
      %v473 = vld [vmem:[%s4 + $0xd8] sm:$0xff]
      %v474 = vld [vmem:[%s4 + $0xe0] sm:$0xff]
      %v475 = vld [vmem:[%s4 + $0xe8] sm:$0xff]
      %v476 = vld [vmem:[%s4 + $0xf0] sm:$0xff]
      %v477 = vld [vmem:[%s4 + $0xf8] sm:$0xff]
      %v478 = vld [vmem:[%s4 + $0x100] sm:$0xff]
      %v479 = vld [vmem:[%s4 + $0x108] sm:$0xff]
      %v480 = vld [vmem:[%s4 + $0x110] sm:$0xff]
      %v481 = vld [vmem:[%s4 + $0x118] sm:$0xff]
      %v482 = vld [vmem:[%s4 + $0x120] sm:$0xff]
      %v483 = vld [vmem:[%s4 + $0x128] sm:$0xff]
      %v484 = vld [vmem:[%s4 + $0x130] sm:$0xff]
      %v485 = vld [vmem:[%s4 + $0x138] sm:$0xff]
      %v486 = vld [vmem:[%s4 + $0x140] sm:$0xff]
      %v487 = vld [vmem:[%s4 + $0x148] sm:$0xff]
      %v488 = vld [vmem:[%s4 + $0x150] sm:$0xff]
      %v489 = vld [vmem:[%s4 + $0x158] sm:$0xff]
      %v490 = vld [vmem:[%s4 + $0x160] sm:$0xff]
      %v491 = vld [vmem:[%s4 + $0x168] sm:$0xff]
      %v492 = vld [vmem:[%s4 + $0x170] sm:$0xff]
      %v493 = vld [vmem:[%s4 + $0x178] sm:$0xff]
      %v494 = vld [vmem:[%s4 + $0x180] sm:$0xff]
      %v495 = vld [vmem:[%s4 + $0x188] sm:$0xff]
      %v496 = vld [vmem:[%s4 + $0x190] sm:$0xff]
      %v497 = vld [vmem:[%s4 + $0x198] sm:$0xff]
      %v498 = vld [vmem:[%s4 + $0x1a0] sm:$0xff]
      %v499 = vld [vmem:[%s4 + $0x1a8] sm:$0xff]
      %v500 = vld [vmem:[%s4 + $0x1b0] sm:$0xff]
      %v501 = vld [vmem:[%s4 + $0x1b8] sm:$0xff]
      %v502 = vld [vmem:[%s4 + $0x1c0] sm:$0xff]
      %v503 = vld [vmem:[%s4 + $0x1c8] sm:$0xff]
      %v504 = vld [vmem:[%s4 + $0x1d0] sm:$0xff]
      %v505 = vld [vmem:[%s4 + $0x1d8] sm:$0xff]
      %v506 = vld [vmem:[%s4 + $0x1e0] sm:$0xff]
      %v507 = vld [vmem:[%s4 + $0x1e8] sm:$0xff]
      %v508 = vld [vmem:[%s4 + $0x1f0] sm:$0xff]
      %v509 = vld [vmem:[%s4 + $0x1f8] sm:$0xff]
      %510 = vmatprep.subr.mxu0 %v447
      %511 = vmatpush1.msra.mxu0 %v446
      %512 = vmatprep.subr.mxu0 %v449
      %513 = vmatpush1.msra.mxu0 %v448
      %514 = vmatprep.subr.mxu0 %v451
      %515 = vmatpush1.msra.mxu0 %v450
      %516 = vmatprep.subr.mxu0 %v453
      %517 = vmatpush1.msra.mxu0 %v452
      %518 = vmatprep.subr.mxu0 %v455
      %519 = vmatpush1.msra.mxu0 %v454
      %520 = vmatprep.subr.mxu0 %v457
      %521 = vmatpush1.msra.mxu0 %v456
      %522 = vmatprep.subr.mxu0 %v459
      %523 = vmatpush1.msra.mxu0 %v458
      %524 = vmatprep.subr.mxu0 %v461
      %525 = vmatpush1.msra.mxu0 %v460
      %526 = vmatprep.subr.mxu0 %v463
      %527 = vmatpush1.msra.mxu0 %v462
      %528 = vmatprep.subr.mxu0 %v465
      %529 = vmatpush1.msra.mxu0 %v464
      %530 = vmatprep.subr.mxu0 %v467
      %531 = vmatpush1.msra.mxu0 %v466
      %532 = vmatprep.subr.mxu0 %v469
      %533 = vmatpush1.msra.mxu0 %v468
      %534 = vmatprep.subr.mxu0 %v471
      %535 = vmatpush1.msra.mxu0 %v470
      %536 = vmatprep.subr.mxu0 %v473
      %537 = vmatpush1.msra.mxu0 %v472
      %538 = vmatprep.subr.mxu0 %v475
      %539 = vmatpush1.msra.mxu0 %v474
      %540 = vmatprep.subr.mxu0 %v477
      %541 = vmatpush1.msra.mxu0 %v476
      %542 = vmatprep.subr.mxu0 %v479
      %543 = vmatpush1.msra.mxu0 %v478
      %544 = vmatprep.subr.mxu0 %v481
      %545 = vmatpush1.msra.mxu0 %v480
      %546 = vmatprep.subr.mxu0 %v483
      %547 = vmatpush1.msra.mxu0 %v482
      %548 = vmatprep.subr.mxu0 %v485
      %549 = vmatpush1.msra.mxu0 %v484
      %550 = vmatprep.subr.mxu0 %v487
      %551 = vmatpush1.msra.mxu0 %v486
      %552 = vmatprep.subr.mxu0 %v489
      %553 = vmatpush1.msra.mxu0 %v488
      %554 = vmatprep.subr.mxu0 %v491
      %555 = vmatpush1.msra.mxu0 %v490
      %556 = vmatprep.subr.mxu0 %v493
      %557 = vmatpush1.msra.mxu0 %v492
      %558 = vmatprep.subr.mxu0 %v495
      %559 = vmatpush1.msra.mxu0 %v494
      %560 = vmatprep.subr.mxu0 %v497
      %561 = vmatpush1.msra.mxu0 %v496
      %562 = vmatprep.subr.mxu0 %v499
      %563 = vmatpush1.msra.mxu0 %v498
      %564 = vmatprep.subr.mxu0 %v501
      %565 = vmatpush1.msra.mxu0 %v500
      %566 = vmatprep.subr.mxu0 %v503
      %567 = vmatpush1.msra.mxu0 %v502
      %568 = vmatprep.subr.mxu0 %v505
      %569 = vmatpush1.msra.mxu0 %v504
      %570 = vmatprep.subr.mxu0 %v507
      %571 = vmatpush1.msra.mxu0 %v506
      %572 = vmatprep.subr.mxu0 %v509
      %573 = vmatpush1.msra.mxu0 %v508
      %574 = vmatprep.mubr.f32.mxu0 %v439
      %575 = vmatmul.mubr.f32.gmra.mrb[0].mxu0 %v438
      %v576 = vpop.f32.mrb[0].mxu0
      %v577 = vadd.f32 0.0, %v576
      %v578 = vpop.f32.mrb[0].mxu0
      %v579 = vadd.f32 0.0, %v578
      %580 = vmatprep.mubr.f32.mxu0 %v441
      %581 = vmatmul.mubr.f32.gmra.mrb[0].mxu0 %v440
      %v582 = vpop.f32.mrb[0].mxu0
      %v583 = vadd.f32 0.0, %v582
      %v584 = vpop.f32.mrb[0].mxu0
      %v585 = vadd.f32 0.0, %v584
      %586 = vmatprep.mubr.f32.mxu0 %v443
      %587 = vmatmul.mubr.f32.gmra.mrb[0].mxu0 %v442
      %v588 = vpop.f32.mrb[0].mxu0
      %v589 = vadd.f32 0.0, %v588
      %v590 = vpop.f32.mrb[0].mxu0
      %v591 = vadd.f32 0.0, %v590
      %592 = vmatprep.mubr.f32.mxu0 %v445
      %593 = vmatmul.mubr.f32.gmra.mrb[0].mxu0 %v444
      %v594 = vpop.f32.mrb[0].mxu0
      %v595 = vadd.f32 0.0, %v594
      %v596 = vpop.f32.mrb[0].mxu0
      %v597 = vadd.f32 0.0, %v596
      %598 = vdwg.mxu0
      %v599 = vld [vmem:[%s5] sm:$0x3]
      %v601 = vlaneseq
      %v602 = vshrl.u32 %v601, 7
      %v603 = vsub.s32 0, %v602
      %v604 = vrot.slane %v599, %v603
      %v605 = vlaneseq
      %v606 = vshrl.u32 %v605, 7
      %v607 = vsub.s32 1, %v606
      %v608 = vrot.slane %v599, %v607
      %v611 = vmul.f32 %v577, %v604
      %v612 = vmul.f32 %v579, %v608
      %v613 = vmul.f32 %v583, %v604
      %v614 = vmul.f32 %v585, %v608
      %v615 = vmul.f32 %v589, %v604
      %v616 = vmul.f32 %v591, %v608
      %v617 = vmul.f32 %v595, %v604
      %v618 = vmul.f32 %v597, %v608
      %v619 = vld [vmem:[%s6] sm:$0x3]
      %v621 = vlaneseq
      %v622 = vshrl.u32 %v621, 7
      %v623 = vsub.s32 0, %v622
      %v624 = vrot.slane %v619, %v623
      %v625 = vlaneseq
      %v626 = vshrl.u32 %v625, 7
      %v627 = vsub.s32 1, %v626
      %v628 = vrot.slane %v619, %v627
      %v631 = vadd.f32 %v611, %v624
      %v632 = vadd.f32 %v612, %v628
      %v633 = vadd.f32 %v613, %v624
      %v634 = vadd.f32 %v614, %v628
      %v635 = vadd.f32 %v615, %v624
      %v636 = vadd.f32 %v616, %v628
      %v637 = vadd.f32 %v617, %v624
      %v638 = vadd.f32 %v618, %v628
      %639 = vst [vmem:[%s282] sm:$0xff] %v631
      %640 = vst [vmem:[%s282 + $0x8] sm:$0xff] %v632
      %641 = vst [vmem:[%s282 + $0x10] sm:$0xff] %v633
      %642 = vst [vmem:[%s282 + $0x18] sm:$0xff] %v634
      %643 = vst [vmem:[%s282 + $0x20] sm:$0xff] %v635
      %644 = vst [vmem:[%s282 + $0x28] sm:$0xff] %v636
      %645 = vst [vmem:[%s282 + $0x30] sm:$0xff] %v637
      %646 = vst [vmem:[%s282 + $0x38] sm:$0xff] %v638
      %s647 = smul.u32 4, %s18
      %p648 = scmp.lt.s32.totalorder %s647, 7
      %s649 = scalar_select %p648, %s647, 7
      %s650 = smul.addr %s649, 2
      %s651 = smul.addr %s650, 8
      %s652 = scalar_lea.vmem %s7, %s651
      // Predicated region
      $region49: #{fc_forward.3} parent=47 // pred_check
        %p653 = pneg %p188
      $region50: #{fc_forward.3} parent=47 // pred_check_branch
        %655 = sbr.rel (%p653) target = $region52
      $region51: #{fc_forward.3} parent=47 // pred_region
        %s656 = smul.u32 4, %s18
      $region52: #{fc_forward.3} parent=47 // pred_fallthru
        _
    $region48: #{fc_forward.3} parent=5 // pred_fallthru
      _
    %p657 = scmp.le.s32.totalorder 2, %s13
    // Predicated region
    $region53: #{fc_forward.3} parent=5 // pred_check
      %p658 = pneg %p657
    $region54: #{fc_forward.3} parent=5 // pred_check_branch
      %660 = sbr.rel (%p658) target = $region56
    $region55: #{fc_forward.3} parent=5 // pred_region
      %s661 = ssub.s32 %s13, 2
      // Predicated region
      $region57: #{fc_forward.3} parent=55 // pred_check
        %p662 = pneg %p194
      $region58: #{fc_forward.3} parent=55 // pred_check_branch
        %664 = sbr.rel (%p662) target = $region60
      $region59: #{fc_forward.3} parent=55 // pred_region
        %s665 = smul.u32 4, %s19
        %p666 = scmp.lt.s32.totalorder %s665, 7
        %s667 = scalar_select %p666, %s665, 7
        %s668 = smul.addr %s667, 2
        %s669 = smul.addr %s668, 8
        %s670 = scalar_lea.vmem %s7, %s669
      $region60: #{fc_forward.3} parent=55 // pred_fallthru
        _
    $region56: #{fc_forward.3} parent=5 // pred_fallthru
      _
  $region6: #{fc_forward.3} parent=0 // loop_footer
    %s17 = sadd.s32 1, %s13
  $region7: #{fc_forward.3} parent=0 // loop_footer_branch
    %12 = sbr.rel target = $region3
  $region8: #{fc_forward.3} parent=0 // loop_exit
    _

// kernel: fc_forward.2
$region0: #{fc_forward.2}
  #allocation0 [shape = 'u32[]', space=smem, size = 0x4, offset = 0x4, fixed_abs, tag = 'smem constant byte address 0x4 - core index']
  #allocation1 [shape = 'u32[144,128]{1,0:T(1,128)}', space=vmem, size = 0x12000, scoped, tag = 'internal scratch']
  %s0 = inlined_call_operand.vmem [shape: f32[64,32], index: 0, kind: input, shape index: {}]
  %s1 = inlined_call_operand.vmem [shape: f32[32,256], index: 1, kind: input, shape index: {}]
  %s2 = inlined_call_operand.vmem [shape: f32[1,256], index: 2, kind: input, shape index: {}]
  %s3 = inlined_call_operand.vmem [shape: f32[1,256], index: 3, kind: input, shape index: {}]
  %s4 = inlined_call_operand.vmem [shape: f32[256,256], index: 4, kind: input, shape index: {}]
  %s5 = inlined_call_operand.vmem [shape: f32[16,256], index: 5, kind: output, shape index: {0}]
  %s6 = inlined_call_operand.vmem [shape: f32[16,256], index: 6, kind: output, shape index: {1}]
  %7 = xla_tuple %s5, %s6
  %s8 = sld [smem:[#allocation0]]
  $region65: #{fc_forward.2} parent=0
    _
  %s10 = ssub.s32 1, %s8
  %s11 = scalar_select 0, %s10, %s8
  loop: start=0, step=1, limit=4
  $region2: #{fc_forward.2} parent=0 // loop_pre_header
    _
  $region3: #{fc_forward.2} parent=0 // loop_header
    %s13 = sphi 0, %s17
    %p14 = scmp.ge.s32.totalorder %s13, 4
    %s20 = sphi 0, %s32
    %s21 = sphi 0, %s28
    %s22 = sphi 0, %s20
    %s23 = sphi 0, %s21
    %s24 = sphi 0, %s22
    %s25 = sphi 0, %s23
    %s37 = sphi 0, %s39
    %s40 = sphi 0, %s37
    %s41 = sphi 0, %s40
    %s57 = sphi 0, %s41
    %s61 = sphi 0, %s61
    %s63 = sphi 0, %s61
    %s64 = sphi 0, %s63
    %s78 = sphi 0, %s64
    %s82 = sphi 0, %s82
    %s84 = sphi 0, %s82
    %s85 = sphi 0, %s84
    %s99 = sphi 0, %s85
    %s103 = sphi 0, %s103
    %s105 = sphi 0, %s103
    %s106 = sphi 0, %s105
    %s120 = sphi 0, %s106
    %s124 = sphi 0, %s124
    %s126 = sphi 0, %s124
    %s127 = sphi 0, %s126
    %s141 = sphi 0, %s127
    %s147 = sphi 0, %s149
    %s150 = sphi 0, %s147
    %s151 = sphi 0, %s150
    %s167 = sphi 0, %s151
    %s173 = sphi 0, %s175
    %s176 = sphi 0, %s173
    %s177 = sphi 0, %s176
    %s193 = sphi 0, %s177
  $region4: #{fc_forward.2} parent=0 // loop_header_branch
    %16 = sbr.rel (%p14) target = $region8
  $region5: #{fc_forward.2} parent=0 // loop_body
    %s18 = ssub.s32 %s13, 1
    %s19 = ssub.s32 %s13, 2
    %s26 = sadd.s32 1, %s21
    %p27 = scmp.ge.s32.totalorder %s26, 1
    %s28 = scalar_select %p27, 0, %s26
    %s29 = sadd.s32 1, %s20
    %s30 = scalar_select %p27, %s29, %s20
    %p31 = scmp.ge.s32.totalorder %s30, 2
    %s32 = scalar_select %p31, 0, %s30
    %s33 = sadd.s32 %s20, %s21
    %s34 = sadd.s32 %s32, %s28
    %s35 = ssub.s32 %s33, %s34
    %p36 = scmp.eq.s32.totalorder %s35, 0
    %s38 = sadd.s32 %s37, 1
    %s39 = scalar_select %p36, %s37, %s38
    %p42 = pneg %p36
    %p43 = scmp.eq.s32.totalorder %s13, 1
    %p44 = por %p42, %p43
    %p45 = scmp.ne.s32.totalorder %s37, %s40
    %p46 = scmp.eq.s32.totalorder %s13, 0
    %p47 = por %p45, %p46
    %p48 = scmp.ne.s32.totalorder %s37, %s40
    %p49 = scmp.eq.s32.totalorder %s18, 1
    %p50 = por %p48, %p49
    %p51 = scmp.ne.s32.totalorder %s40, %s41
    %p52 = scmp.eq.s32.totalorder %s18, 0
    %p53 = por %p51, %p52
    %p54 = scmp.ne.s32.totalorder %s40, %s41
    %p55 = scmp.eq.s32.totalorder %s19, 1
    %p56 = por %p54, %p55
    %p58 = scmp.ne.s32.totalorder %s41, %s57
    %p59 = scmp.eq.s32.totalorder %s19, 0
    %p60 = por %p58, %p59
    %s62 = sadd.s32 %s61, 1
    %p65 = scmp.eq.s32.totalorder %s13, 1
    %p66 = scmp.ne.s32.totalorder %s61, %s63
    %p67 = scmp.eq.s32.totalorder %s13, 0
    %p68 = por %p66, %p67
    %p69 = scmp.ne.s32.totalorder %s61, %s63
    %p70 = scmp.eq.s32.totalorder %s18, 1
    %p71 = por %p69, %p70
    %p72 = scmp.ne.s32.totalorder %s63, %s64
    %p73 = scmp.eq.s32.totalorder %s18, 0
    %p74 = por %p72, %p73
    %p75 = scmp.ne.s32.totalorder %s63, %s64
    %p76 = scmp.eq.s32.totalorder %s19, 1
    %p77 = por %p75, %p76
    %p79 = scmp.ne.s32.totalorder %s64, %s78
    %p80 = scmp.eq.s32.totalorder %s19, 0
    %p81 = por %p79, %p80
    %s83 = sadd.s32 %s82, 1
    %p86 = scmp.eq.s32.totalorder %s13, 1
    %p87 = scmp.ne.s32.totalorder %s82, %s84
    %p88 = scmp.eq.s32.totalorder %s13, 0
    %p89 = por %p87, %p88
    %p90 = scmp.ne.s32.totalorder %s82, %s84
    %p91 = scmp.eq.s32.totalorder %s18, 1
    %p92 = por %p90, %p91
    %p93 = scmp.ne.s32.totalorder %s84, %s85
    %p94 = scmp.eq.s32.totalorder %s18, 0
    %p95 = por %p93, %p94
    %p96 = scmp.ne.s32.totalorder %s84, %s85
    %p97 = scmp.eq.s32.totalorder %s19, 1
    %p98 = por %p96, %p97
    %p100 = scmp.ne.s32.totalorder %s85, %s99
    %p101 = scmp.eq.s32.totalorder %s19, 0
    %p102 = por %p100, %p101
    %s104 = sadd.s32 %s103, 1
    %p107 = scmp.eq.s32.totalorder %s13, 1
    %p108 = scmp.ne.s32.totalorder %s103, %s105
    %p109 = scmp.eq.s32.totalorder %s13, 0
    %p110 = por %p108, %p109
    %p111 = scmp.ne.s32.totalorder %s103, %s105
    %p112 = scmp.eq.s32.totalorder %s18, 1
    %p113 = por %p111, %p112
    %p114 = scmp.ne.s32.totalorder %s105, %s106
    %p115 = scmp.eq.s32.totalorder %s18, 0
    %p116 = por %p114, %p115
    %p117 = scmp.ne.s32.totalorder %s105, %s106
    %p118 = scmp.eq.s32.totalorder %s19, 1
    %p119 = por %p117, %p118
    %p121 = scmp.ne.s32.totalorder %s106, %s120
    %p122 = scmp.eq.s32.totalorder %s19, 0
    %p123 = por %p121, %p122
    %s125 = sadd.s32 %s124, 1
    %p128 = scmp.eq.s32.totalorder %s13, 1
    %p129 = scmp.ne.s32.totalorder %s124, %s126
    %p130 = scmp.eq.s32.totalorder %s13, 0
    %p131 = por %p129, %p130
    %p132 = scmp.ne.s32.totalorder %s124, %s126
    %p133 = scmp.eq.s32.totalorder %s18, 1
    %p134 = por %p132, %p133
    %p135 = scmp.ne.s32.totalorder %s126, %s127
    %p136 = scmp.eq.s32.totalorder %s18, 0
    %p137 = por %p135, %p136
    %p138 = scmp.ne.s32.totalorder %s126, %s127
    %p139 = scmp.eq.s32.totalorder %s19, 1
    %p140 = por %p138, %p139
    %p142 = scmp.ne.s32.totalorder %s127, %s141
    %p143 = scmp.eq.s32.totalorder %s19, 0
    %p144 = por %p142, %p143
    %s145 = ssub.s32 %s20, %s32
    %p146 = scmp.eq.s32.totalorder %s145, 0
    %s148 = sadd.s32 %s147, 1
    %s149 = scalar_select %p146, %s147, %s148
    %p152 = pneg %p146
    %p153 = scmp.eq.s32.totalorder %s13, 1
    %p154 = por %p152, %p153
    %p155 = scmp.ne.s32.totalorder %s147, %s150
    %p156 = scmp.eq.s32.totalorder %s13, 0
    %p157 = por %p155, %p156
    %p158 = scmp.ne.s32.totalorder %s147, %s150
    %p159 = scmp.eq.s32.totalorder %s18, 1
    %p160 = por %p158, %p159
    %p161 = scmp.ne.s32.totalorder %s150, %s151
    %p162 = scmp.eq.s32.totalorder %s18, 0
    %p163 = por %p161, %p162
    %p164 = scmp.ne.s32.totalorder %s150, %s151
    %p165 = scmp.eq.s32.totalorder %s19, 1
    %p166 = por %p164, %p165
    %p168 = scmp.ne.s32.totalorder %s151, %s167
    %p169 = scmp.eq.s32.totalorder %s19, 0
    %p170 = por %p168, %p169
    %s171 = ssub.s32 %s20, %s32
    %p172 = scmp.eq.s32.totalorder %s171, 0
    %s174 = sadd.s32 %s173, 1
    %s175 = scalar_select %p172, %s173, %s174
    %p178 = pneg %p172
    %p179 = scmp.eq.s32.totalorder %s13, 1
    %p180 = por %p178, %p179
    %p181 = scmp.ne.s32.totalorder %s173, %s176
    %p182 = scmp.eq.s32.totalorder %s13, 0
    %p183 = por %p181, %p182
    %p184 = scmp.ne.s32.totalorder %s173, %s176
    %p185 = scmp.eq.s32.totalorder %s18, 1
    %p186 = por %p184, %p185
    %p187 = scmp.ne.s32.totalorder %s176, %s177
    %p188 = scmp.eq.s32.totalorder %s18, 0
    %p189 = por %p187, %p188
    %p190 = scmp.ne.s32.totalorder %s176, %s177
    %p191 = scmp.eq.s32.totalorder %s19, 1
    %p192 = por %p190, %p191
    %p194 = scmp.ne.s32.totalorder %s177, %s193
    %p195 = scmp.eq.s32.totalorder %s19, 0
    %p196 = por %p194, %p195
    %p197 = scmp.le.s32.totalorder 1, %s13
    %p198 = scmp.lt.s32.totalorder %s13, 3
    %p199 = pnand %p197, %p198
    %p200 = pneg %p199
    // Predicated region
    $region9: #{fc_forward.2} parent=5 // pred_check
      _
    $region10: #{fc_forward.2} parent=5 // pred_check_branch
      %202 = sbr.rel (%p199) target = $region12
    $region11: #{fc_forward.2} parent=5 // pred_region
      %s203 = ssub.s32 %s13, 1
      // Predicated region
      $region13: #{fc_forward.2} parent=11 // pred_check
        %p204 = pneg %p74
      $region14: #{fc_forward.2} parent=11 // pred_check_branch
        %206 = sbr.rel (%p204) target = $region16
      $region15: #{fc_forward.2} parent=11 // pred_region
        _
      $region16: #{fc_forward.2} parent=11 // pred_fallthru
        _
      // Predicated region
      $region17: #{fc_forward.2} parent=11 // pred_check
        %p207 = pneg %p95
      $region18: #{fc_forward.2} parent=11 // pred_check_branch
        %209 = sbr.rel (%p207) target = $region20
      $region19: #{fc_forward.2} parent=11 // pred_region
        _
      $region20: #{fc_forward.2} parent=11 // pred_fallthru
        _
      // Predicated region
      $region21: #{fc_forward.2} parent=11 // pred_check
        %p210 = pneg %p116
      $region22: #{fc_forward.2} parent=11 // pred_check_branch
        %212 = sbr.rel (%p210) target = $region24
      $region23: #{fc_forward.2} parent=11 // pred_region
        _
      $region24: #{fc_forward.2} parent=11 // pred_fallthru
        _
      // Predicated region
      $region25: #{fc_forward.2} parent=11 // pred_check
        %p213 = pneg %p137
      $region26: #{fc_forward.2} parent=11 // pred_check_branch
        %215 = sbr.rel (%p213) target = $region28
      $region27: #{fc_forward.2} parent=11 // pred_region
        _
      $region28: #{fc_forward.2} parent=11 // pred_fallthru
        _
    $region12: #{fc_forward.2} parent=5 // pred_fallthru
      _
    %p216 = scmp.lt.s32.totalorder %s13, 2
    // Predicated region
    $region29: #{fc_forward.2} parent=5 // pred_check
      %p217 = pneg %p216
    $region30: #{fc_forward.2} parent=5 // pred_check_branch
      %219 = sbr.rel (%p217) target = $region32
    $region31: #{fc_forward.2} parent=5 // pred_region
      // Predicated region
      $region33: #{fc_forward.2} parent=31 // pred_check
        %p220 = pneg %p47
      $region34: #{fc_forward.2} parent=31 // pred_check_branch
        %222 = sbr.rel (%p220) target = $region36
      $region35: #{fc_forward.2} parent=31 // pred_region
        %s223 = sadd.s32 %s20, %s21
        %s224 = smul.u32 4, %s223
        %p225 = scmp.lt.s32.totalorder %s224, 7
        %s226 = scalar_select %p225, %s224, 7
        %s227 = smul.addr %s226, 8
        %s228 = scalar_lea.vmem %s0, %s227
        %s229 = sadd.s32 %s20, %s21
        %s230 = smul.u32 4, %s229
      $region36: #{fc_forward.2} parent=31 // pred_fallthru
        _
    $region32: #{fc_forward.2} parent=5 // pred_fallthru
      _
    %p231 = scmp.le.s32.totalorder 1, %s13
    %p232 = scmp.lt.s32.totalorder %s13, 3
    %p233 = pnand %p231, %p232
    %p234 = pneg %p233
    // Predicated region
    $region37: #{fc_forward.2} parent=5 // pred_check
      _
    $region38: #{fc_forward.2} parent=5 // pred_check_branch
      %236 = sbr.rel (%p233) target = $region40
    $region39: #{fc_forward.2} parent=5 // pred_region
      %s237 = ssub.s32 %s13, 1
      %s238 = sadd.s32 %s22, %s23
      %s239 = smul.u32 4, %s238
      %p240 = scmp.lt.s32.totalorder %s239, 7
      %s241 = scalar_select %p240, %s239, 7
      %s242 = smul.addr %s241, 8
      %s243 = scalar_lea.vmem %s0, %s242
      %p244 = pneg %p53
      %p245 = pneg %p50
      %p246 = pneg %p74
      %p247 = pneg %p71
      %p248 = pneg %p95
      %p249 = pneg %p92
      %p250 = pneg %p116
      %p251 = pneg %p113
      %p252 = pneg %p137
      %p253 = pneg %p134
      %p254 = pneg %p163
      %p255 = pneg %p160
      %p256 = scmp.lt.s32.totalorder %s22, 1
      %s257 = scalar_select %p256, %s22, 1
      %s258 = smul.addr %s257, 2
      %s259 = smul.addr %s258, 8
      %s260 = scalar_lea.vmem %s5, %s259
      %p261 = pneg %p189
      %p262 = pneg %p186
      %p263 = scmp.lt.s32.totalorder %s22, 1
      %s264 = scalar_select %p263, %s22, 1
      %s265 = smul.addr %s264, 2
      %s266 = smul.addr %s265, 8
      %s267 = scalar_lea.vmem %s6, %s266
      %s268 = sadd.s32 %s22, %s23
      %s269 = smul.u32 4, %s268
      %p270 = scmp.lt.s32.totalorder %s269, 7
      %s271 = scalar_select %p270, %s269, 7
      %s272 = smul.addr %s271, 8
      %s273 = scalar_lea.vmem %s0, %s272
      %s274 = sadd.s32 %s22, %s23
      %s275 = smul.u32 4, %s274
      %p276 = scmp.lt.s32.totalorder %s22, 1
      %s277 = scalar_select %p276, %s22, 1
      %s278 = smul.addr %s277, 2
      %s279 = smul.addr %s278, 8
      %s280 = scalar_lea.vmem %s5, %s279
      %p281 = scmp.lt.s32.totalorder %s22, 1
      %s282 = scalar_select %p281, %s22, 1
      %s283 = smul.addr %s282, 2
      %s284 = smul.addr %s283, 8
      %s285 = scalar_lea.vmem %s6, %s284
      %p286 = scmp.eq.s32.totalorder %s23, 0
      // Predicated region
      $region41: #{fc_forward.2} parent=39 // pred_check
        %p287 = pneg %p286
      $region42: #{fc_forward.2} parent=39 // pred_check_branch
        %289 = sbr.rel (%p287) target = $region44
      $region43: #{fc_forward.2} parent=39 // pred_region
        %290 = vst [vmem:[%s280] sm:$0xff] 0.0
        %291 = vst [vmem:[%s280 + $0x8] sm:$0xff] 0.0
        %292 = vst [vmem:[%s285] sm:$0xff] 0.0
        %293 = vst [vmem:[%s285 + $0x8] sm:$0xff] 0.0
      $region44: #{fc_forward.2} parent=39 // pred_fallthru
        _
      %v294 = vld [vmem:[%s273] sm:$0xff]
      %v295 = vld [vmem:[%s273 + $0x8] sm:$0xff]
      %v296 = vld [vmem:[%s273 + $0x10] sm:$0xff]
      %v297 = vld [vmem:[%s273 + $0x18] sm:$0xff]
      %v298 = vld [vmem:[%s1] sm:$0xff]
      %v299 = vld [vmem:[%s1 + $0x8] sm:$0xff]
      %v300 = vld [vmem:[%s1 + $0x10] sm:$0xff]
      %v301 = vld [vmem:[%s1 + $0x18] sm:$0xff]
      %v302 = vld [vmem:[%s1 + $0x20] sm:$0xff]
      %v303 = vld [vmem:[%s1 + $0x28] sm:$0xff]
      %v304 = vld [vmem:[%s1 + $0x30] sm:$0xff]
      %v305 = vld [vmem:[%s1 + $0x38] sm:$0xff]
      %vm306 = vcmask 261120
      %v308 = vsel %vm306, %v294, 0
      %v311 = vsel %vm306, %v295, 0
      %v314 = vsel %vm306, %v296, 0
      %v317 = vsel %vm306, %v297, 0
      %319 = vmatprep.subr.mxu0 %v299
      %320 = vmatpush1.msra.mxu0 %v298
      %321 = vmatprep.subr.mxu0 %v301
      %322 = vmatpush1.msra.mxu0 %v300
      %323 = vmatprep.subr.mxu0 %v303
      %324 = vmatpush1.msra.mxu0 %v302
      %325 = vmatprep.subr.mxu0 %v305
      %326 = vmatpush1.msra.mxu0 %v304
      %327 = vmatprep.subr.mxu0 0.0
      %328 = vmatpush1.msra.mxu0 0.0
      %329 = vmatprep.subr.mxu0 0.0
      %330 = vmatpush1.msra.mxu0 0.0
      %331 = vmatprep.subr.mxu0 0.0
      %332 = vmatpush1.msra.mxu0 0.0
      %333 = vmatprep.subr.mxu0 0.0
      %334 = vmatpush1.msra.mxu0 0.0
      %335 = vmatprep.subr.mxu0 0.0
      %336 = vmatpush1.msra.mxu0 0.0
      %337 = vmatprep.subr.mxu0 0.0
      %338 = vmatpush1.msra.mxu0 0.0
      %339 = vmatprep.subr.mxu0 0.0
      %340 = vmatpush1.msra.mxu0 0.0
      %341 = vmatprep.subr.mxu0 0.0
      %342 = vmatpush1.msra.mxu0 0.0
      %343 = vmatprep.subr.mxu0 0.0
      %344 = vmatpush1.msra.mxu0 0.0
      %345 = vmatprep.subr.mxu0 0.0
      %346 = vmatpush1.msra.mxu0 0.0
      %347 = vmatprep.subr.mxu0 0.0
      %348 = vmatpush1.msra.mxu0 0.0
      %349 = vmatprep.subr.mxu0 0.0
      %350 = vmatpush1.msra.mxu0 0.0
      %351 = vmatprep.subr.mxu0 0.0
      %352 = vmatpush1.msra.mxu0 0.0
      %353 = vmatprep.subr.mxu0 0.0
      %354 = vmatpush1.msra.mxu0 0.0
      %355 = vmatprep.subr.mxu0 0.0
      %356 = vmatpush1.msra.mxu0 0.0
      %357 = vmatprep.subr.mxu0 0.0
      %358 = vmatpush1.msra.mxu0 0.0
      %359 = vmatprep.subr.mxu0 0.0
      %360 = vmatpush1.msra.mxu0 0.0
      %361 = vmatprep.subr.mxu0 0.0
      %362 = vmatpush1.msra.mxu0 0.0
      %363 = vmatprep.subr.mxu0 0.0
      %364 = vmatpush1.msra.mxu0 0.0
      %365 = vmatprep.subr.mxu0 0.0
      %366 = vmatpush1.msra.mxu0 0.0
      %367 = vmatprep.subr.mxu0 0.0
      %368 = vmatpush1.msra.mxu0 0.0
      %369 = vmatprep.subr.mxu0 0.0
      %370 = vmatpush1.msra.mxu0 0.0
      %371 = vmatprep.subr.mxu0 0.0
      %372 = vmatpush1.msra.mxu0 0.0
      %373 = vmatprep.subr.mxu0 0.0
      %374 = vmatpush1.msra.mxu0 0.0
      %375 = vmatprep.subr.mxu0 0.0
      %376 = vmatpush1.msra.mxu0 0.0
      %377 = vmatprep.subr.mxu0 0.0
      %378 = vmatpush1.msra.mxu0 0.0
      %379 = vmatprep.subr.mxu0 0.0
      %380 = vmatpush1.msra.mxu0 0.0
      %381 = vmatprep.subr.mxu0 0.0
      %382 = vmatpush1.msra.mxu0 0.0
      %383 = vmatprep.mubr.f32.mxu0 0.0
      %384 = vmatmul.mubr.f32.gmra.mrb[0].mxu0 %v308
      %v385 = vpop.f32.mrb[0].mxu0
      %v386 = vadd.f32 0.0, %v385
      %v387 = vpop.f32.mrb[0].mxu0
      %v388 = vadd.f32 0.0, %v387
      %389 = vmatprep.mubr.f32.mxu0 0.0
      %390 = vmatmul.mubr.f32.gmra.mrb[0].mxu0 %v311
      %v391 = vpop.f32.mrb[0].mxu0
      %v392 = vadd.f32 0.0, %v391
      %v393 = vpop.f32.mrb[0].mxu0
      %v394 = vadd.f32 0.0, %v393
      %395 = vmatprep.mubr.f32.mxu0 0.0
      %396 = vmatmul.mubr.f32.gmra.mrb[0].mxu0 %v314
      %v397 = vpop.f32.mrb[0].mxu0
      %v398 = vadd.f32 0.0, %v397
      %v399 = vpop.f32.mrb[0].mxu0
      %v400 = vadd.f32 0.0, %v399
      %401 = vmatprep.mubr.f32.mxu0 0.0
      %402 = vmatmul.mubr.f32.gmra.mrb[0].mxu0 %v317
      %v403 = vpop.f32.mrb[0].mxu0
      %v404 = vadd.f32 0.0, %v403
      %v405 = vpop.f32.mrb[0].mxu0
      %v406 = vadd.f32 0.0, %v405
      %407 = vdwg.mxu0
      %v408 = vld [vmem:[%s2] sm:$0x3]
      %v410 = vlaneseq
      %v411 = vshrl.u32 %v410, 7
      %v412 = vsub.s32 0, %v411
      %v413 = vrot.slane %v408, %v412
      %v414 = vlaneseq
      %v415 = vshrl.u32 %v414, 7
      %v416 = vsub.s32 1, %v415
      %v417 = vrot.slane %v408, %v416
      %v420 = vmul.f32 %v386, %v413
      %v421 = vmul.f32 %v388, %v417
      %v422 = vmul.f32 %v392, %v413
      %v423 = vmul.f32 %v394, %v417
      %v424 = vmul.f32 %v398, %v413
      %v425 = vmul.f32 %v400, %v417
      %v426 = vmul.f32 %v404, %v413
      %v427 = vmul.f32 %v406, %v417
      %v428 = vld [vmem:[%s3] sm:$0x3]
      %v430 = vlaneseq
      %v431 = vshrl.u32 %v430, 7
      %v432 = vsub.s32 0, %v431
      %v433 = vrot.slane %v428, %v432
      %v434 = vlaneseq
      %v435 = vshrl.u32 %v434, 7
      %v436 = vsub.s32 1, %v435
      %v437 = vrot.slane %v428, %v436
      %v440 = vadd.f32 %v420, %v433
      %v441 = vadd.f32 %v421, %v437
      %v442 = vadd.f32 %v422, %v433
      %v443 = vadd.f32 %v423, %v437
      %v444 = vadd.f32 %v424, %v433
      %v445 = vadd.f32 %v425, %v437
      %v446 = vadd.f32 %v426, %v433
      %v447 = vadd.f32 %v427, %v437
      %v448 = vmax.f32 %v440, 0.0
      %v449 = vmax.f32 %v441, 0.0
      %v450 = vmax.f32 %v442, 0.0
      %v451 = vmax.f32 %v443, 0.0
      %v452 = vmax.f32 %v444, 0.0
      %v453 = vmax.f32 %v445, 0.0
      %v454 = vmax.f32 %v446, 0.0
      %v455 = vmax.f32 %v447, 0.0
      %v456 = vld [vmem:[%s4] sm:$0xff]
      %v457 = vld [vmem:[%s4 + $0x8] sm:$0xff]
      %v458 = vld [vmem:[%s4 + $0x10] sm:$0xff]
      %v459 = vld [vmem:[%s4 + $0x18] sm:$0xff]
      %v460 = vld [vmem:[%s4 + $0x20] sm:$0xff]
      %v461 = vld [vmem:[%s4 + $0x28] sm:$0xff]
      %v462 = vld [vmem:[%s4 + $0x30] sm:$0xff]
      %v463 = vld [vmem:[%s4 + $0x38] sm:$0xff]
      %v464 = vld [vmem:[%s4 + $0x40] sm:$0xff]
      %v465 = vld [vmem:[%s4 + $0x48] sm:$0xff]
      %v466 = vld [vmem:[%s4 + $0x50] sm:$0xff]
      %v467 = vld [vmem:[%s4 + $0x58] sm:$0xff]
      %v468 = vld [vmem:[%s4 + $0x60] sm:$0xff]
      %v469 = vld [vmem:[%s4 + $0x68] sm:$0xff]
      %v470 = vld [vmem:[%s4 + $0x70] sm:$0xff]
      %v471 = vld [vmem:[%s4 + $0x78] sm:$0xff]
      %v472 = vld [vmem:[%s4 + $0x80] sm:$0xff]
      %v473 = vld [vmem:[%s4 + $0x88] sm:$0xff]
      %v474 = vld [vmem:[%s4 + $0x90] sm:$0xff]
      %v475 = vld [vmem:[%s4 + $0x98] sm:$0xff]
      %v476 = vld [vmem:[%s4 + $0xa0] sm:$0xff]
      %v477 = vld [vmem:[%s4 + $0xa8] sm:$0xff]
      %v478 = vld [vmem:[%s4 + $0xb0] sm:$0xff]
      %v479 = vld [vmem:[%s4 + $0xb8] sm:$0xff]
      %v480 = vld [vmem:[%s4 + $0xc0] sm:$0xff]
      %v481 = vld [vmem:[%s4 + $0xc8] sm:$0xff]
      %v482 = vld [vmem:[%s4 + $0xd0] sm:$0xff]
      %v483 = vld [vmem:[%s4 + $0xd8] sm:$0xff]
      %v484 = vld [vmem:[%s4 + $0xe0] sm:$0xff]
      %v485 = vld [vmem:[%s4 + $0xe8] sm:$0xff]
      %v486 = vld [vmem:[%s4 + $0xf0] sm:$0xff]
      %v487 = vld [vmem:[%s4 + $0xf8] sm:$0xff]
      %v488 = vld [vmem:[%s4 + $0x100] sm:$0xff]
      %v489 = vld [vmem:[%s4 + $0x108] sm:$0xff]
      %v490 = vld [vmem:[%s4 + $0x110] sm:$0xff]
      %v491 = vld [vmem:[%s4 + $0x118] sm:$0xff]
      %v492 = vld [vmem:[%s4 + $0x120] sm:$0xff]
      %v493 = vld [vmem:[%s4 + $0x128] sm:$0xff]
      %v494 = vld [vmem:[%s4 + $0x130] sm:$0xff]
      %v495 = vld [vmem:[%s4 + $0x138] sm:$0xff]
      %v496 = vld [vmem:[%s4 + $0x140] sm:$0xff]
      %v497 = vld [vmem:[%s4 + $0x148] sm:$0xff]
      %v498 = vld [vmem:[%s4 + $0x150] sm:$0xff]
      %v499 = vld [vmem:[%s4 + $0x158] sm:$0xff]
      %v500 = vld [vmem:[%s4 + $0x160] sm:$0xff]
      %v501 = vld [vmem:[%s4 + $0x168] sm:$0xff]
      %v502 = vld [vmem:[%s4 + $0x170] sm:$0xff]
      %v503 = vld [vmem:[%s4 + $0x178] sm:$0xff]
      %v504 = vld [vmem:[%s4 + $0x180] sm:$0xff]
      %v505 = vld [vmem:[%s4 + $0x188] sm:$0xff]
      %v506 = vld [vmem:[%s4 + $0x190] sm:$0xff]
      %v507 = vld [vmem:[%s4 + $0x198] sm:$0xff]
      %v508 = vld [vmem:[%s4 + $0x1a0] sm:$0xff]
      %v509 = vld [vmem:[%s4 + $0x1a8] sm:$0xff]
      %v510 = vld [vmem:[%s4 + $0x1b0] sm:$0xff]
      %v511 = vld [vmem:[%s4 + $0x1b8] sm:$0xff]
      %v512 = vld [vmem:[%s4 + $0x1c0] sm:$0xff]
      %v513 = vld [vmem:[%s4 + $0x1c8] sm:$0xff]
      %v514 = vld [vmem:[%s4 + $0x1d0] sm:$0xff]
      %v515 = vld [vmem:[%s4 + $0x1d8] sm:$0xff]
      %v516 = vld [vmem:[%s4 + $0x1e0] sm:$0xff]
      %v517 = vld [vmem:[%s4 + $0x1e8] sm:$0xff]
      %v518 = vld [vmem:[%s4 + $0x1f0] sm:$0xff]
      %v519 = vld [vmem:[%s4 + $0x1f8] sm:$0xff]
      %520 = vmatprep.subr.mxu0 %v457
      %521 = vmatpush1.msra.mxu0 %v456
      %522 = vmatprep.subr.mxu0 %v459
      %523 = vmatpush1.msra.mxu0 %v458
      %524 = vmatprep.subr.mxu0 %v461
      %525 = vmatpush1.msra.mxu0 %v460
      %526 = vmatprep.subr.mxu0 %v463
      %527 = vmatpush1.msra.mxu0 %v462
      %528 = vmatprep.subr.mxu0 %v465
      %529 = vmatpush1.msra.mxu0 %v464
      %530 = vmatprep.subr.mxu0 %v467
      %531 = vmatpush1.msra.mxu0 %v466
      %532 = vmatprep.subr.mxu0 %v469
      %533 = vmatpush1.msra.mxu0 %v468
      %534 = vmatprep.subr.mxu0 %v471
      %535 = vmatpush1.msra.mxu0 %v470
      %536 = vmatprep.subr.mxu0 %v473
      %537 = vmatpush1.msra.mxu0 %v472
      %538 = vmatprep.subr.mxu0 %v475
      %539 = vmatpush1.msra.mxu0 %v474
      %540 = vmatprep.subr.mxu0 %v477
      %541 = vmatpush1.msra.mxu0 %v476
      %542 = vmatprep.subr.mxu0 %v479
      %543 = vmatpush1.msra.mxu0 %v478
      %544 = vmatprep.subr.mxu0 %v481
      %545 = vmatpush1.msra.mxu0 %v480
      %546 = vmatprep.subr.mxu0 %v483
      %547 = vmatpush1.msra.mxu0 %v482
      %548 = vmatprep.subr.mxu0 %v485
      %549 = vmatpush1.msra.mxu0 %v484
      %550 = vmatprep.subr.mxu0 %v487
      %551 = vmatpush1.msra.mxu0 %v486
      %552 = vmatprep.subr.mxu0 %v489
      %553 = vmatpush1.msra.mxu0 %v488
      %554 = vmatprep.subr.mxu0 %v491
      %555 = vmatpush1.msra.mxu0 %v490
      %556 = vmatprep.subr.mxu0 %v493
      %557 = vmatpush1.msra.mxu0 %v492
      %558 = vmatprep.subr.mxu0 %v495
      %559 = vmatpush1.msra.mxu0 %v494
      %560 = vmatprep.subr.mxu0 %v497
      %561 = vmatpush1.msra.mxu0 %v496
      %562 = vmatprep.subr.mxu0 %v499
      %563 = vmatpush1.msra.mxu0 %v498
      %564 = vmatprep.subr.mxu0 %v501
      %565 = vmatpush1.msra.mxu0 %v500
      %566 = vmatprep.subr.mxu0 %v503
      %567 = vmatpush1.msra.mxu0 %v502
      %568 = vmatprep.subr.mxu0 %v505
      %569 = vmatpush1.msra.mxu0 %v504
      %570 = vmatprep.subr.mxu0 %v507
      %571 = vmatpush1.msra.mxu0 %v506
      %572 = vmatprep.subr.mxu0 %v509
      %573 = vmatpush1.msra.mxu0 %v508
      %574 = vmatprep.subr.mxu0 %v511
      %575 = vmatpush1.msra.mxu0 %v510
      %576 = vmatprep.subr.mxu0 %v513
      %577 = vmatpush1.msra.mxu0 %v512
      %578 = vmatprep.subr.mxu0 %v515
      %579 = vmatpush1.msra.mxu0 %v514
      %580 = vmatprep.subr.mxu0 %v517
      %581 = vmatpush1.msra.mxu0 %v516
      %582 = vmatprep.subr.mxu0 %v519
      %583 = vmatpush1.msra.mxu0 %v518
      %584 = vmatprep.mubr.f32.mxu0 %v449
      %585 = vmatmul.mubr.f32.gmra.mrb[0].mxu0 %v448
      %v586 = vpop.f32.mrb[0].mxu0
      %v587 = vadd.f32 0.0, %v586
      %v588 = vpop.f32.mrb[0].mxu0
      %v589 = vadd.f32 0.0, %v588
      %590 = vmatprep.mubr.f32.mxu0 %v451
      %591 = vmatmul.mubr.f32.gmra.mrb[0].mxu0 %v450
      %v592 = vpop.f32.mrb[0].mxu0
      %v593 = vadd.f32 0.0, %v592
      %v594 = vpop.f32.mrb[0].mxu0
      %v595 = vadd.f32 0.0, %v594
      %596 = vmatprep.mubr.f32.mxu0 %v453
      %597 = vmatmul.mubr.f32.gmra.mrb[0].mxu0 %v452
      %v598 = vpop.f32.mrb[0].mxu0
      %v599 = vadd.f32 0.0, %v598
      %v600 = vpop.f32.mrb[0].mxu0
      %v601 = vadd.f32 0.0, %v600
      %602 = vmatprep.mubr.f32.mxu0 %v455
      %603 = vmatmul.mubr.f32.gmra.mrb[0].mxu0 %v454
      %v604 = vpop.f32.mrb[0].mxu0
      %v605 = vadd.f32 0.0, %v604
      %v606 = vpop.f32.mrb[0].mxu0
      %v607 = vadd.f32 0.0, %v606
      %608 = vdwg.mxu0
      %v609 = vld [vmem:[%s280] sm:$0xff]
      %v610 = vld [vmem:[%s280 + $0x8] sm:$0xff]
      %v611 = vadd.f32 %v587, %v593
      %v612 = vadd.f32 %v611, %v599
      %v613 = vadd.f32 %v612, %v605
      %v614 = vadd.f32 %v589, %v595
      %v615 = vadd.f32 %v614, %v601
      %v616 = vadd.f32 %v615, %v607
      %v617 = vadd.f32 %v609, %v613
      %v618 = vadd.f32 %v610, %v616
      %619 = vst [vmem:[%s280] sm:$0xff] %v617
      %620 = vst [vmem:[%s280 + $0x8] sm:$0xff] %v618
      %v621 = vld [vmem:[%s285] sm:$0xff]
      %v622 = vld [vmem:[%s285 + $0x8] sm:$0xff]
      %v623 = vmul.f32 %v587, %v587
      %v624 = vmul.f32 %v589, %v589
      %v625 = vmul.f32 %v593, %v593
      %v626 = vmul.f32 %v595, %v595
      %v627 = vmul.f32 %v599, %v599
      %v628 = vmul.f32 %v601, %v601
      %v629 = vmul.f32 %v605, %v605
      %v630 = vmul.f32 %v607, %v607
      %v631 = vadd.f32 %v623, %v625
      %v632 = vadd.f32 %v631, %v627
      %v633 = vadd.f32 %v632, %v629
      %v634 = vadd.f32 %v624, %v626
      %v635 = vadd.f32 %v634, %v628
      %v636 = vadd.f32 %v635, %v630
      %v637 = vadd.f32 %v621, %v633
      %v638 = vadd.f32 %v622, %v636
      %639 = vst [vmem:[%s285] sm:$0xff] %v637
      %640 = vst [vmem:[%s285 + $0x8] sm:$0xff] %v638
      %p641 = scmp.lt.s32.totalorder %s22, 1
      %s642 = scalar_select %p641, %s22, 1
      %s643 = smul.addr %s642, 2
      %s644 = smul.addr %s643, 8
      %s645 = scalar_lea.vmem %s5, %s644
      %p646 = scmp.lt.s32.totalorder %s22, 1
      %s647 = scalar_select %p646, %s22, 1
      %s648 = smul.addr %s647, 2
      %s649 = smul.addr %s648, 8
      %s650 = scalar_lea.vmem %s6, %s649
      // Predicated region
      $region45: #{fc_forward.2} parent=39 // pred_check
        %p651 = pneg %p160
      $region46: #{fc_forward.2} parent=39 // pred_check_branch
        %653 = sbr.rel (%p651) target = $region48
      $region47: #{fc_forward.2} parent=39 // pred_region
        _
      $region48: #{fc_forward.2} parent=39 // pred_fallthru
        _
      // Predicated region
      $region49: #{fc_forward.2} parent=39 // pred_check
        %p654 = pneg %p186
      $region50: #{fc_forward.2} parent=39 // pred_check_branch
        %656 = sbr.rel (%p654) target = $region52
      $region51: #{fc_forward.2} parent=39 // pred_region
        _
      $region52: #{fc_forward.2} parent=39 // pred_fallthru
        _
    $region40: #{fc_forward.2} parent=5 // pred_fallthru
      _
    %p657 = scmp.le.s32.totalorder 2, %s13
    // Predicated region
    $region53: #{fc_forward.2} parent=5 // pred_check
      %p658 = pneg %p657
    $region54: #{fc_forward.2} parent=5 // pred_check_branch
      %660 = sbr.rel (%p658) target = $region56
    $region55: #{fc_forward.2} parent=5 // pred_region
      %s661 = ssub.s32 %s13, 2
      // Predicated region
      $region57: #{fc_forward.2} parent=55 // pred_check
        %p662 = pneg %p166
      $region58: #{fc_forward.2} parent=55 // pred_check_branch
        %664 = sbr.rel (%p662) target = $region60
      $region59: #{fc_forward.2} parent=55 // pred_region
        %p665 = scmp.lt.s32.totalorder %s24, 1
        %s666 = scalar_select %p665, %s24, 1
        %s667 = smul.addr %s666, 2
        %s668 = smul.addr %s667, 8
        %s669 = scalar_lea.vmem %s5, %s668
      $region60: #{fc_forward.2} parent=55 // pred_fallthru
        _
      // Predicated region
      $region61: #{fc_forward.2} parent=55 // pred_check
        %p670 = pneg %p192
      $region62: #{fc_forward.2} parent=55 // pred_check_branch
        %672 = sbr.rel (%p670) target = $region64
      $region63: #{fc_forward.2} parent=55 // pred_region
        %p673 = scmp.lt.s32.totalorder %s24, 1
        %s674 = scalar_select %p673, %s24, 1
        %s675 = smul.addr %s674, 2
        %s676 = smul.addr %s675, 8
        %s677 = scalar_lea.vmem %s6, %s676
      $region64: #{fc_forward.2} parent=55 // pred_fallthru
        _
    $region56: #{fc_forward.2} parent=5 // pred_fallthru
      _
  $region6: #{fc_forward.2} parent=0 // loop_footer
    %s17 = sadd.s32 1, %s13
  $region7: #{fc_forward.2} parent=0 // loop_footer_branch
    %12 = sbr.rel target = $region3
  $region8: #{fc_forward.2} parent=0 // loop_exit
    _

</llo_original>
